<compile_context>
chip_gen: v7x
topology: tpu7x:2x2x1
jax: 0.10.0
libtpu: 0.0.40
codegen_flags: <defaults>
</compile_context>

<pallas_src>
import functools

import jax
import jax.numpy as jnp
from jax.experimental import pallas as pl
from jax.experimental.pallas import tpu as pltpu

OUT_PAD = 128  # lane-dense padded width of the final Linear(E -> 3) output


def aggregater2_kernel(
    # fused, time-major-flattened input
    x_ref,                                            # (T*B, D1+D2)
    # fused + gate-interleaved GRU params
    w_ih_ref,                                         # (D1+D2, 6E) block-diag, [r1|r2|z1|z2|n1|n2]
    b_gi_ref,                                         # (1, 6E)  (r/z incl. b_hh)
    w_hh_ref,                                         # (2E, 6E) block-diag, same column order
    b_hhn_ref,                                        # (1, 2E) = [b_hh1_n | b_hh2_n]
    # aggregation head params
    w_inter_ref, b_inter_ref,                         # (2E, E), (1, E)
    w_final_ref, b_final_ref,                         # (E, OUT_PAD), (1, OUT_PAD)
    # output
    o_ref,                                            # (T*B, OUT_PAD)
    # scratch
    gi_scr,                                           # (T*B, 6E) f32
    hcat_scr,                                         # (T*B, 2E) f32
    *, B, unroll,
):
    TB = x_ref.shape[0]
    T = TB // B
    E2 = hcat_scr.shape[1]          # 2E (both GRUs interleaved per gate)
    E4 = 2 * E2

    # --- hoisted, fused input projection: one MXU matmul for both GRUs ------
    gi_scr[...] = (jnp.dot(x_ref[...], w_ih_ref[...],
                           preferred_element_type=jnp.float32)
                   + b_gi_ref[...].astype(jnp.float32))

    w_hh = w_hh_ref[...]                                        # loaded once
    b_hhn_b = jnp.broadcast_to(b_hhn_ref[...].astype(jnp.float32),
                               (B, E2))                         # hoisted broadcast

    def step(t, h_cat):             # h_cat: (B, 2E) = [h1 | h2], f32
        row = pl.multiple_of(t * B, B)
        gh = jnp.dot(h_cat, w_hh, preferred_element_type=jnp.float32)  # (B, 6E)
        gi = gi_scr[pl.ds(row, B), :]                                  # (B, 6E)
        # PyTorch nn.GRU gate order (r, z, n); both GRUs handled at once.
        r = jax.nn.sigmoid(gi[:, :E2] + gh[:, :E2])
        z = jax.nn.sigmoid(gi[:, E2:E4] + gh[:, E2:E4])
        n = jnp.tanh(gi[:, E4:] + r * (gh[:, E4:] + b_hhn_b))
        h_new = (1.0 - z) * n + z * h_cat                              # (B, 2E)
        hcat_scr[pl.ds(row, B), :] = h_new
        return h_new

    h0 = jnp.zeros((B, E2), jnp.float32)
    jax.lax.fori_loop(0, T, step, h0, unroll=unroll)

    # --- aggregation head, batched over all T*B rows (no recurrence) --------
    # cat -> inter_layer -> ReLU -> (dropout = identity, eval) -> final_out
    inter = jnp.maximum(
        jnp.dot(hcat_scr[...].astype(w_inter_ref.dtype), w_inter_ref[...],
                preferred_element_type=jnp.float32) + b_inter_ref[...], 0.0)
    o_ref[...] = (jnp.dot(inter.astype(w_final_ref.dtype), w_final_ref[...],
                          preferred_element_type=jnp.float32)
                  + b_final_ref[...])


# ------------------------- wrapper-side param plumbing -----------------------
def _interleave_cols(wa_t, wb_t, E):
    """Block-diagonal + gate-interleaved: (Da,3E),(Db,3E) -> (Da+Db, 6E).

    Column order [r1|r2|z1|z2|n1|n2]; rows [:Da] feed GRU-1 gates, rows [Da:]
    feed GRU-2 gates.
    """
    Da, Db = wa_t.shape[0], wb_t.shape[0]
    out = jnp.zeros((Da + Db, 6 * E), jnp.float32)
    for g in range(3):
        out = out.at[:Da, (2 * g) * E:(2 * g + 1) * E].set(wa_t[:, g * E:(g + 1) * E])
        out = out.at[Da:, (2 * g + 1) * E:(2 * g + 2) * E].set(wb_t[:, g * E:(g + 1) * E])
    return out


def _interleave_gates(ba, bb, E):
    """(3E,),(3E,) -> (6E,) in order [r1|r2|z1|z2|n1|n2]."""
    return jnp.concatenate([ba[:E], bb[:E],
                            ba[E:2 * E], bb[E:2 * E],
                            ba[2 * E:], bb[2 * E:]])


def aggregater2_forward(x1, x2, params, *, use_bf16_matmul=False):
    """x1: (B, T, D1), x2: (B, T, D2) float32. Returns (B, T, 3).

    use_bf16_matmul: cast MXU operands (inputs / input-proj / head weights) to
    bf16 on v6e/v7x for ~2x MXU rate at production sizes. Default off to keep
    exact f32 parity with the PyTorch module at these toy sizes; the recurrent
    state / hidden weights stay f32 either way.
    """
    B, T, D1 = x1.shape
    _, _, D2 = x2.shape
    E = params["w_hh1"].shape[1]   # w_hh1 is (3E, E)
    TB = T * B

    # glue: time-major flattened layout + fused feature axis so the kernel sees
    # one lane-dense slab and the recurrence slices rows [t*B, t*B+B).
    x1_flat = jnp.transpose(x1, (1, 0, 2)).reshape(TB, D1)
    x2_flat = jnp.transpose(x2, (1, 0, 2)).reshape(TB, D2)
    x_cat = jnp.concatenate([x1_flat, x2_flat], axis=1)          # (T*B, D1+D2)

    # glue: block-diagonal, gate-interleaved weights -> one MXU push per phase.
    w_ih_block = _interleave_cols(params["w_ih1"].T, params["w_ih2"].T, E)  # (D1+D2, 6E)
    w_hh_block = _interleave_cols(params["w_hh1"].T, params["w_hh2"].T, E)  # (2E, 6E)

    # glue: fold r/z biases (b_ih + b_hh) into the input-projection bias;
    # the n-gate b_hh must NOT be folded (it is multiplied by r).
    b_ih_i = _interleave_gates(params["b_ih1"], params["b_ih2"], E)         # (6E,)
    b_hh_i = _interleave_gates(params["b_hh1"], params["b_hh2"], E)         # (6E,)
    b_gi = (b_ih_i + jnp.concatenate(
        [b_hh_i[:4 * E], jnp.zeros((2 * E,), jnp.float32)])).reshape(1, -1)  # (1, 6E)
    b_hhn = b_hh_i[4 * E:].reshape(1, -1)                                    # (1, 2E)

    w_inter_t = params["w_inter"].T                   # (2E, E)
    b_inter = params["b_inter"].reshape(1, -1)        # (1, E)
    # glue: pad final_out to 128 columns so the output store is lane-dense.
    w_final_pad = jnp.zeros((E, OUT_PAD), jnp.float32).at[:, :3].set(params["w_final"].T)
    b_final_pad = jnp.zeros((1, OUT_PAD), jnp.float32).at[:, :3].set(
        params["b_final"].reshape(1, -1))

    mm_dtype = jnp.bfloat16 if use_bf16_matmul else jnp.float32
    x_cat_mm = x_cat.astype(mm_dtype)
    w_ih_mm = w_ih_block.astype(mm_dtype)
    w_inter_mm = w_inter_t.astype(mm_dtype)
    w_final_mm = w_final_pad.astype(mm_dtype)

    # Full unroll only while T is small; partial unroll keeps code size / vreg
    # live ranges bounded at larger T.
    unroll = True if T <= 32 else 8

    # rough resident-VMEM budget (no pipelining in this grid-free design)
    itm = 2 if use_bf16_matmul else 4
    vmem_bytes = (TB * (D1 + D2) * itm + (D1 + D2) * 6 * E * itm + 6 * E * 4
                  + 2 * E * 6 * E * 4 + 2 * E * 4 + 2 * E * E * itm + E * 4
                  + E * OUT_PAD * itm + OUT_PAD * 4 + TB * OUT_PAD * 4
                  + TB * 6 * E * 4 + TB * 2 * E * 4)
    vmem_limit = int(min(max(2 * vmem_bytes, 16 << 20), 32 << 20))

    vmem = pl.BlockSpec(memory_space=pltpu.MemorySpace.VMEM)

    out_flat = pl.pallas_call(
        functools.partial(aggregater2_kernel, B=B, unroll=unroll),
        out_shape=jax.ShapeDtypeStruct((TB, OUT_PAD), jnp.float32),
        in_specs=[vmem] * 9,
        out_specs=vmem,
        scratch_shapes=[
            pltpu.VMEM((TB, 6 * E), jnp.float32),   # fused hoisted input proj
            pltpu.VMEM((TB, 2 * E), jnp.float32),   # concatenated hidden history
        ],
        compiler_params=pltpu.CompilerParams(vmem_limit_bytes=vmem_limit),
    )(x_cat_mm, w_ih_mm, b_gi, w_hh_block, b_hhn,
      w_inter_mm, b_inter, w_final_mm, b_final_pad)

    # glue: drop lane padding, back to batch-first (B, T, 3)
    return jnp.transpose(out_flat[:, :3].reshape(T, B, 3), (1, 0, 2))


# ----------------------------- pure-JAX reference ---------------------------
def _gru_ref(x, w_ih, w_hh, b_ih, b_hh):
    B, T, _ = x.shape
    E = w_hh.shape[1]

    def step(h, xt):
        gi = xt @ w_ih.T + b_ih
        gh = h @ w_hh.T + b_hh
        r = jax.nn.sigmoid(gi[:, :E] + gh[:, :E])
        z = jax.nn.sigmoid(gi[:, E:2 * E] + gh[:, E:2 * E])
        n = jnp.tanh(gi[:, 2 * E:] + r * gh[:, 2 * E:])
        hn = (1.0 - z) * n + z * h
        return hn, hn

    h0 = jnp.zeros((B, E), jnp.float32)
    _, hs = jax.lax.scan(step, h0, jnp.transpose(x, (1, 0, 2)))
    return jnp.transpose(hs, (1, 0, 2))  # (B, T, E)


def aggregater2_reference(x1, x2, p):
    out_1 = _gru_ref(x1, p["w_ih1"], p["w_hh1"], p["b_ih1"], p["b_hh1"])
    out_2 = _gru_ref(x2, p["w_ih2"], p["w_hh2"], p["b_ih2"], p["b_hh2"])
    out = jnp.concatenate([out_1, out_2], axis=2)
    out = jnp.maximum(out @ p["w_inter"].T + p["b_inter"], 0.0)
    out = out @ p["w_final"].T + p["b_final"]
    return out


# ---------------------------------- main -------------------------------------
if __name__ == "__main__":
    B, T, D1, D2, E = 8, 8, 8, 8, 32

    key = jax.random.PRNGKey(0)
    keys = jax.random.split(key, 16)

    def init(k, shape, scale=0.1):
        return jax.random.uniform(k, shape, jnp.float32, -1.0, 1.0) * scale

    params = {
        # model_1: GRU(D1 -> E)
        "w_ih1": init(keys[0], (3 * E, D1)),
        "w_hh1": init(keys[1], (3 * E, E)),
        "b_ih1": init(keys[2], (3 * E,)),
        "b_hh1": init(keys[3], (3 * E,)),
        # model_2: GRU(D2 -> E)
        "w_ih2": init(keys[4], (3 * E, D2)),
        "w_hh2": init(keys[5], (3 * E, E)),
        "b_ih2": init(keys[6], (3 * E,)),
        "b_hh2": init(keys[7], (3 * E,)),
        # inter_layer: Linear(2E -> E)
        "w_inter": init(keys[8], (E, 2 * E)),
        "b_inter": init(keys[9], (E,)),
        # final_out: Linear(E -> 3)
        "w_final": init(keys[10], (3, E)),
        "b_final": init(keys[11], (3,)),
    }

    x1 = jax.random.normal(keys[12], (B, T, D1), jnp.float32)
    x2 = jax.random.normal(keys[13], (B, T, D2), jnp.float32)

    out = aggregater2_forward(x1, x2, params)
    out = jax.block_until_ready(out)

    ref = jax.block_until_ready(aggregater2_reference(x1, x2, params))

    assert out.shape == (B, T, 3), out.shape
    max_err = float(jnp.max(jnp.abs(out - ref)))
    assert max_err < 1e-4, f"max abs err {max_err}"

    print("KERNEL_OK")
</pallas_src>

<mosaic_0001>
module attributes {stable_mosaic.version = 11 : i64} {
  func.func @aggregater2_kernel(%arg0: memref<64x16xf32, #tpu.memory_space<vmem>>, %arg1: memref<16x192xf32, #tpu.memory_space<vmem>>, %arg2: memref<1x192xf32, #tpu.memory_space<vmem>>, %arg3: memref<64x192xf32, #tpu.memory_space<vmem>>, %arg4: memref<1x64xf32, #tpu.memory_space<vmem>>, %arg5: memref<64x32xf32, #tpu.memory_space<vmem>>, %arg6: memref<1x32xf32, #tpu.memory_space<vmem>>, %arg7: memref<32x128xf32, #tpu.memory_space<vmem>>, %arg8: memref<1x128xf32, #tpu.memory_space<vmem>>, %arg9: memref<64x128xf32, #tpu.memory_space<vmem>>, %arg10: memref<64x192xf32, #tpu.memory_space<vmem>>, %arg11: memref<64x64xf32, #tpu.memory_space<vmem>>) attributes {dimension_semantics = [], scalar_prefetch = 0 : i64, scratch_operands = 2 : i64, tpu.core_type = #tpu.core_type<tc>} {
    %c0 = arith.constant 0 : index
    %c0_0 = arith.constant 0 : index
    %0 = vector.load %arg0[%c0, %c0_0] : memref<64x16xf32, #tpu.memory_space<vmem>>, vector<64x16xf32>
    %c0_1 = arith.constant 0 : index
    %c0_2 = arith.constant 0 : index
    %1 = vector.load %arg1[%c0_1, %c0_2] : memref<16x192xf32, #tpu.memory_space<vmem>>, vector<16x192xf32>
    %cst = arith.constant dense<0.000000e+00> : vector<64x192xf32>
    %2 = tpu.matmul %0, %1, %cst {dimension_numbers = #tpu.dot_dimension_numbers<[1], [0], [0], [1], [0, 0, 1, 1], [], []>} : vector<64x16xf32>, vector<16x192xf32>, vector<64x192xf32> -> vector<64x192xf32>
    %c0_3 = arith.constant 0 : index
    %c0_4 = arith.constant 0 : index
    %3 = vector.load %arg2[%c0_3, %c0_4] : memref<1x192xf32, #tpu.memory_space<vmem>>, vector<1x192xf32>
    %4 = vector.broadcast %3 : vector<1x192xf32> to vector<64x192xf32>
    %5 = arith.addf %2, %4 : vector<64x192xf32>
    %c0_5 = arith.constant 0 : index
    %c0_6 = arith.constant 0 : index
    %6 = vector.load %arg10[%c0_5, %c0_6] : memref<64x192xf32, #tpu.memory_space<vmem>>, vector<64x192xf32>
    tpu.vector_store %arg10[%c0_5, %c0_6], %5 {strides = array<i32>} : memref<64x192xf32, #tpu.memory_space<vmem>>, vector<64x192xf32>,
    %c0_7 = arith.constant 0 : index
    %c0_8 = arith.constant 0 : index
    %7 = vector.load %arg3[%c0_7, %c0_8] : memref<64x192xf32, #tpu.memory_space<vmem>>, vector<64x192xf32>
    %c0_9 = arith.constant 0 : index
    %c0_10 = arith.constant 0 : index
    %8 = vector.load %arg4[%c0_9, %c0_10] : memref<1x64xf32, #tpu.memory_space<vmem>>, vector<1x64xf32>
    %9 = vector.shape_cast %8 : vector<1x64xf32> to vector<1x64xf32>
    %10 = vector.broadcast %9 : vector<1x64xf32> to vector<8x64xf32>
    %cst_11 = arith.constant 0.000000e+00 : f32
    %11 = vector.broadcast %cst_11 : f32 to vector<8x64xf32>
    %c0_i32 = arith.constant 0 : i32
    %c8_i32 = arith.constant 8 : i32
    %12 = arith.muli %c0_i32, %c8_i32 : i32
    %13 = tpu.assume_multiple %12, 8 : i32
    %cst_12 = arith.constant dense<0.000000e+00> : vector<8x192xf32>
    %14 = tpu.matmul %11, %7, %cst_12 {dimension_numbers = #tpu.dot_dimension_numbers<[1], [0], [0], [1], [0, 0, 1, 1], [], []>} : vector<8x64xf32>, vector<64x192xf32>, vector<8x192xf32> -> vector<8x192xf32>
    %15 = arith.index_cast %13 : i32 to index
    %c0_13 = arith.constant 0 : index
    %16 = vector.load %arg10[%15, %c0_13] : memref<64x192xf32, #tpu.memory_space<vmem>>, vector<8x192xf32>
    %17 = vector.extract_strided_slice %16 {offsets = [0, 0], sizes = [8, 64], strides = [1, 1]} : vector<8x192xf32> to vector<8x64xf32>
    %18 = vector.extract_strided_slice %14 {offsets = [0, 0], sizes = [8, 64], strides = [1, 1]} : vector<8x192xf32> to vector<8x64xf32>
    %19 = arith.addf %17, %18 : vector<8x64xf32>
    %20 = arith.negf %19 : vector<8x64xf32>
    %21 = math.exp %20 : vector<8x64xf32>
    %cst_14 = arith.constant 1.000000e+00 : f32
    %22 = vector.broadcast %cst_14 : f32 to vector<8x64xf32>
    %23 = arith.addf %22, %21 : vector<8x64xf32>
    %24 = arith.divf %22, %23 : vector<8x64xf32>
    %25 = vector.extract_strided_slice %16 {offsets = [0, 64], sizes = [8, 64], strides = [1, 1]} : vector<8x192xf32> to vector<8x64xf32>
    %26 = vector.extract_strided_slice %14 {offsets = [0, 64], sizes = [8, 64], strides = [1, 1]} : vector<8x192xf32> to vector<8x64xf32>
    %27 = arith.addf %25, %26 : vector<8x64xf32>
    %28 = arith.negf %27 : vector<8x64xf32>
    %29 = math.exp %28 : vector<8x64xf32>
    %cst_15 = arith.constant 1.000000e+00 : f32
    %30 = vector.broadcast %cst_15 : f32 to vector<8x64xf32>
    %31 = arith.addf %30, %29 : vector<8x64xf32>
    %32 = arith.divf %30, %31 : vector<8x64xf32>
    %33 = vector.extract_strided_slice %16 {offsets = [0, 128], sizes = [8, 64], strides = [1, 1]} : vector<8x192xf32> to vector<8x64xf32>
    %34 = vector.extract_strided_slice %14 {offsets = [0, 128], sizes = [8, 64], strides = [1, 1]} : vector<8x192xf32> to vector<8x64xf32>
    %35 = arith.addf %34, %10 : vector<8x64xf32>
    %36 = arith.mulf %24, %35 : vector<8x64xf32>
    %37 = arith.addf %33, %36 : vector<8x64xf32>
    %38 = math.tanh %37 : vector<8x64xf32>
    %cst_16 = arith.constant 1.000000e+00 : f32
    %39 = vector.broadcast %cst_16 : f32 to vector<8x64xf32>
    %40 = arith.subf %39, %32 : vector<8x64xf32>
    %41 = arith.mulf %40, %38 : vector<8x64xf32>
    %42 = arith.mulf %32, %11 : vector<8x64xf32>
    %43 = arith.addf %41, %42 : vector<8x64xf32>
    %44 = arith.index_cast %13 : i32 to index
    %c0_17 = arith.constant 0 : index
    %45 = vector.load %arg11[%44, %c0_17] : memref<64x64xf32, #tpu.memory_space<vmem>>, vector<8x64xf32>
    tpu.vector_store %arg11[%44, %c0_17], %43 {strides = array<i32>} : memref<64x64xf32, #tpu.memory_space<vmem>>, vector<8x64xf32>,
    %c1_i32 = arith.constant 1 : i32
    %c8_i32_18 = arith.constant 8 : i32
    %46 = arith.muli %c1_i32, %c8_i32_18 : i32
    %47 = tpu.assume_multiple %46, 8 : i32
    %cst_19 = arith.constant dense<0.000000e+00> : vector<8x192xf32>
    %48 = tpu.matmul %43, %7, %cst_19 {dimension_numbers = #tpu.dot_dimension_numbers<[1], [0], [0], [1], [0, 0, 1, 1], [], []>} : vector<8x64xf32>, vector<64x192xf32>, vector<8x192xf32> -> vector<8x192xf32>
    %49 = arith.index_cast %47 : i32 to index
    %c0_20 = arith.constant 0 : index
    %50 = vector.load %arg10[%49, %c0_20] : memref<64x192xf32, #tpu.memory_space<vmem>>, vector<8x192xf32>
    %51 = vector.extract_strided_slice %50 {offsets = [0, 0], sizes = [8, 64], strides = [1, 1]} : vector<8x192xf32> to vector<8x64xf32>
    %52 = vector.extract_strided_slice %48 {offsets = [0, 0], sizes = [8, 64], strides = [1, 1]} : vector<8x192xf32> to vector<8x64xf32>
    %53 = arith.addf %51, %52 : vector<8x64xf32>
    %54 = arith.negf %53 : vector<8x64xf32>
    %55 = math.exp %54 : vector<8x64xf32>
    %cst_21 = arith.constant 1.000000e+00 : f32
    %56 = vector.broadcast %cst_21 : f32 to vector<8x64xf32>
    %57 = arith.addf %56, %55 : vector<8x64xf32>
    %58 = arith.divf %56, %57 : vector<8x64xf32>
    %59 = vector.extract_strided_slice %50 {offsets = [0, 64], sizes = [8, 64], strides = [1, 1]} : vector<8x192xf32> to vector<8x64xf32>
    %60 = vector.extract_strided_slice %48 {offsets = [0, 64], sizes = [8, 64], strides = [1, 1]} : vector<8x192xf32> to vector<8x64xf32>
    %61 = arith.addf %59, %60 : vector<8x64xf32>
    %62 = arith.negf %61 : vector<8x64xf32>
    %63 = math.exp %62 : vector<8x64xf32>
    %cst_22 = arith.constant 1.000000e+00 : f32
    %64 = vector.broadcast %cst_22 : f32 to vector<8x64xf32>
    %65 = arith.addf %64, %63 : vector<8x64xf32>
    %66 = arith.divf %64, %65 : vector<8x64xf32>
    %67 = vector.extract_strided_slice %50 {offsets = [0, 128], sizes = [8, 64], strides = [1, 1]} : vector<8x192xf32> to vector<8x64xf32>
    %68 = vector.extract_strided_slice %48 {offsets = [0, 128], sizes = [8, 64], strides = [1, 1]} : vector<8x192xf32> to vector<8x64xf32>
    %69 = arith.addf %68, %10 : vector<8x64xf32>
    %70 = arith.mulf %58, %69 : vector<8x64xf32>
    %71 = arith.addf %67, %70 : vector<8x64xf32>
    %72 = math.tanh %71 : vector<8x64xf32>
    %cst_23 = arith.constant 1.000000e+00 : f32
    %73 = vector.broadcast %cst_23 : f32 to vector<8x64xf32>
    %74 = arith.subf %73, %66 : vector<8x64xf32>
    %75 = arith.mulf %74, %72 : vector<8x64xf32>
    %76 = arith.mulf %66, %43 : vector<8x64xf32>
    %77 = arith.addf %75, %76 : vector<8x64xf32>
    %78 = arith.index_cast %47 : i32 to index
    %c0_24 = arith.constant 0 : index
    %79 = vector.load %arg11[%78, %c0_24] : memref<64x64xf32, #tpu.memory_space<vmem>>, vector<8x64xf32>
    tpu.vector_store %arg11[%78, %c0_24], %77 {strides = array<i32>} : memref<64x64xf32, #tpu.memory_space<vmem>>, vector<8x64xf32>,
    %c2_i32 = arith.constant 2 : i32
    %c8_i32_25 = arith.constant 8 : i32
    %80 = arith.muli %c2_i32, %c8_i32_25 : i32
    %81 = tpu.assume_multiple %80, 8 : i32
    %cst_26 = arith.constant dense<0.000000e+00> : vector<8x192xf32>
    %82 = tpu.matmul %77, %7, %cst_26 {dimension_numbers = #tpu.dot_dimension_numbers<[1], [0], [0], [1], [0, 0, 1, 1], [], []>} : vector<8x64xf32>, vector<64x192xf32>, vector<8x192xf32> -> vector<8x192xf32>
    %83 = arith.index_cast %81 : i32 to index
    %c0_27 = arith.constant 0 : index
    %84 = vector.load %arg10[%83, %c0_27] : memref<64x192xf32, #tpu.memory_space<vmem>>, vector<8x192xf32>
    %85 = vector.extract_strided_slice %84 {offsets = [0, 0], sizes = [8, 64], strides = [1, 1]} : vector<8x192xf32> to vector<8x64xf32>
    %86 = vector.extract_strided_slice %82 {offsets = [0, 0], sizes = [8, 64], strides = [1, 1]} : vector<8x192xf32> to vector<8x64xf32>
    %87 = arith.addf %85, %86 : vector<8x64xf32>
    %88 = arith.negf %87 : vector<8x64xf32>
    %89 = math.exp %88 : vector<8x64xf32>
    %cst_28 = arith.constant 1.000000e+00 : f32
    %90 = vector.broadcast %cst_28 : f32 to vector<8x64xf32>
    %91 = arith.addf %90, %89 : vector<8x64xf32>
    %92 = arith.divf %90, %91 : vector<8x64xf32>
    %93 = vector.extract_strided_slice %84 {offsets = [0, 64], sizes = [8, 64], strides = [1, 1]} : vector<8x192xf32> to vector<8x64xf32>
    %94 = vector.extract_strided_slice %82 {offsets = [0, 64], sizes = [8, 64], strides = [1, 1]} : vector<8x192xf32> to vector<8x64xf32>
    %95 = arith.addf %93, %94 : vector<8x64xf32>
    %96 = arith.negf %95 : vector<8x64xf32>
    %97 = math.exp %96 : vector<8x64xf32>
    %cst_29 = arith.constant 1.000000e+00 : f32
    %98 = vector.broadcast %cst_29 : f32 to vector<8x64xf32>
    %99 = arith.addf %98, %97 : vector<8x64xf32>
    %100 = arith.divf %98, %99 : vector<8x64xf32>
    %101 = vector.extract_strided_slice %84 {offsets = [0, 128], sizes = [8, 64], strides = [1, 1]} : vector<8x192xf32> to vector<8x64xf32>
    %102 = vector.extract_strided_slice %82 {offsets = [0, 128], sizes = [8, 64], strides = [1, 1]} : vector<8x192xf32> to vector<8x64xf32>
    %103 = arith.addf %102, %10 : vector<8x64xf32>
    %104 = arith.mulf %92, %103 : vector<8x64xf32>
    %105 = arith.addf %101, %104 : vector<8x64xf32>
    %106 = math.tanh %105 : vector<8x64xf32>
    %cst_30 = arith.constant 1.000000e+00 : f32
    %107 = vector.broadcast %cst_30 : f32 to vector<8x64xf32>
    %108 = arith.subf %107, %100 : vector<8x64xf32>
    %109 = arith.mulf %108, %106 : vector<8x64xf32>
    %110 = arith.mulf %100, %77 : vector<8x64xf32>
    %111 = arith.addf %109, %110 : vector<8x64xf32>
    %112 = arith.index_cast %81 : i32 to index
    %c0_31 = arith.constant 0 : index
    %113 = vector.load %arg11[%112, %c0_31] : memref<64x64xf32, #tpu.memory_space<vmem>>, vector<8x64xf32>
    tpu.vector_store %arg11[%112, %c0_31], %111 {strides = array<i32>} : memref<64x64xf32, #tpu.memory_space<vmem>>, vector<8x64xf32>,
    %c3_i32 = arith.constant 3 : i32
    %c8_i32_32 = arith.constant 8 : i32
    %114 = arith.muli %c3_i32, %c8_i32_32 : i32
    %115 = tpu.assume_multiple %114, 8 : i32
    %cst_33 = arith.constant dense<0.000000e+00> : vector<8x192xf32>
    %116 = tpu.matmul %111, %7, %cst_33 {dimension_numbers = #tpu.dot_dimension_numbers<[1], [0], [0], [1], [0, 0, 1, 1], [], []>} : vector<8x64xf32>, vector<64x192xf32>, vector<8x192xf32> -> vector<8x192xf32>
    %117 = arith.index_cast %115 : i32 to index
    %c0_34 = arith.constant 0 : index
    %118 = vector.load %arg10[%117, %c0_34] : memref<64x192xf32, #tpu.memory_space<vmem>>, vector<8x192xf32>
    %119 = vector.extract_strided_slice %118 {offsets = [0, 0], sizes = [8, 64], strides = [1, 1]} : vector<8x192xf32> to vector<8x64xf32>
    %120 = vector.extract_strided_slice %116 {offsets = [0, 0], sizes = [8, 64], strides = [1, 1]} : vector<8x192xf32> to vector<8x64xf32>
    %121 = arith.addf %119, %120 : vector<8x64xf32>
    %122 = arith.negf %121 : vector<8x64xf32>
    %123 = math.exp %122 : vector<8x64xf32>
    %cst_35 = arith.constant 1.000000e+00 : f32
    %124 = vector.broadcast %cst_35 : f32 to vector<8x64xf32>
    %125 = arith.addf %124, %123 : vector<8x64xf32>
    %126 = arith.divf %124, %125 : vector<8x64xf32>
    %127 = vector.extract_strided_slice %118 {offsets = [0, 64], sizes = [8, 64], strides = [1, 1]} : vector<8x192xf32> to vector<8x64xf32>
    %128 = vector.extract_strided_slice %116 {offsets = [0, 64], sizes = [8, 64], strides = [1, 1]} : vector<8x192xf32> to vector<8x64xf32>
    %129 = arith.addf %127, %128 : vector<8x64xf32>
    %130 = arith.negf %129 : vector<8x64xf32>
    %131 = math.exp %130 : vector<8x64xf32>
    %cst_36 = arith.constant 1.000000e+00 : f32
    %132 = vector.broadcast %cst_36 : f32 to vector<8x64xf32>
    %133 = arith.addf %132, %131 : vector<8x64xf32>
    %134 = arith.divf %132, %133 : vector<8x64xf32>
    %135 = vector.extract_strided_slice %118 {offsets = [0, 128], sizes = [8, 64], strides = [1, 1]} : vector<8x192xf32> to vector<8x64xf32>
    %136 = vector.extract_strided_slice %116 {offsets = [0, 128], sizes = [8, 64], strides = [1, 1]} : vector<8x192xf32> to vector<8x64xf32>
    %137 = arith.addf %136, %10 : vector<8x64xf32>
    %138 = arith.mulf %126, %137 : vector<8x64xf32>
    %139 = arith.addf %135, %138 : vector<8x64xf32>
    %140 = math.tanh %139 : vector<8x64xf32>
    %cst_37 = arith.constant 1.000000e+00 : f32
    %141 = vector.broadcast %cst_37 : f32 to vector<8x64xf32>
    %142 = arith.subf %141, %134 : vector<8x64xf32>
    %143 = arith.mulf %142, %140 : vector<8x64xf32>
    %144 = arith.mulf %134, %111 : vector<8x64xf32>
    %145 = arith.addf %143, %144 : vector<8x64xf32>
    %146 = arith.index_cast %115 : i32 to index
    %c0_38 = arith.constant 0 : index
    %147 = vector.load %arg11[%146, %c0_38] : memref<64x64xf32, #tpu.memory_space<vmem>>, vector<8x64xf32>
    tpu.vector_store %arg11[%146, %c0_38], %145 {strides = array<i32>} : memref<64x64xf32, #tpu.memory_space<vmem>>, vector<8x64xf32>,
    %c4_i32 = arith.constant 4 : i32
    %c8_i32_39 = arith.constant 8 : i32
    %148 = arith.muli %c4_i32, %c8_i32_39 : i32
    %149 = tpu.assume_multiple %148, 8 : i32
    %cst_40 = arith.constant dense<0.000000e+00> : vector<8x192xf32>
    %150 = tpu.matmul %145, %7, %cst_40 {dimension_numbers = #tpu.dot_dimension_numbers<[1], [0], [0], [1], [0, 0, 1, 1], [], []>} : vector<8x64xf32>, vector<64x192xf32>, vector<8x192xf32> -> vector<8x192xf32>
    %151 = arith.index_cast %149 : i32 to index
    %c0_41 = arith.constant 0 : index
    %152 = vector.load %arg10[%151, %c0_41] : memref<64x192xf32, #tpu.memory_space<vmem>>, vector<8x192xf32>
    %153 = vector.extract_strided_slice %152 {offsets = [0, 0], sizes = [8, 64], strides = [1, 1]} : vector<8x192xf32> to vector<8x64xf32>
    %154 = vector.extract_strided_slice %150 {offsets = [0, 0], sizes = [8, 64], strides = [1, 1]} : vector<8x192xf32> to vector<8x64xf32>
    %155 = arith.addf %153, %154 : vector<8x64xf32>
    %156 = arith.negf %155 : vector<8x64xf32>
    %157 = math.exp %156 : vector<8x64xf32>
    %cst_42 = arith.constant 1.000000e+00 : f32
    %158 = vector.broadcast %cst_42 : f32 to vector<8x64xf32>
    %159 = arith.addf %158, %157 : vector<8x64xf32>
    %160 = arith.divf %158, %159 : vector<8x64xf32>
    %161 = vector.extract_strided_slice %152 {offsets = [0, 64], sizes = [8, 64], strides = [1, 1]} : vector<8x192xf32> to vector<8x64xf32>
    %162 = vector.extract_strided_slice %150 {offsets = [0, 64], sizes = [8, 64], strides = [1, 1]} : vector<8x192xf32> to vector<8x64xf32>
    %163 = arith.addf %161, %162 : vector<8x64xf32>
    %164 = arith.negf %163 : vector<8x64xf32>
    %165 = math.exp %164 : vector<8x64xf32>
    %cst_43 = arith.constant 1.000000e+00 : f32
    %166 = vector.broadcast %cst_43 : f32 to vector<8x64xf32>
    %167 = arith.addf %166, %165 : vector<8x64xf32>
    %168 = arith.divf %166, %167 : vector<8x64xf32>
    %169 = vector.extract_strided_slice %152 {offsets = [0, 128], sizes = [8, 64], strides = [1, 1]} : vector<8x192xf32> to vector<8x64xf32>
    %170 = vector.extract_strided_slice %150 {offsets = [0, 128], sizes = [8, 64], strides = [1, 1]} : vector<8x192xf32> to vector<8x64xf32>
    %171 = arith.addf %170, %10 : vector<8x64xf32>
    %172 = arith.mulf %160, %171 : vector<8x64xf32>
    %173 = arith.addf %169, %172 : vector<8x64xf32>
    %174 = math.tanh %173 : vector<8x64xf32>
    %cst_44 = arith.constant 1.000000e+00 : f32
    %175 = vector.broadcast %cst_44 : f32 to vector<8x64xf32>
    %176 = arith.subf %175, %168 : vector<8x64xf32>
    %177 = arith.mulf %176, %174 : vector<8x64xf32>
    %178 = arith.mulf %168, %145 : vector<8x64xf32>
    %179 = arith.addf %177, %178 : vector<8x64xf32>
    %180 = arith.index_cast %149 : i32 to index
    %c0_45 = arith.constant 0 : index
    %181 = vector.load %arg11[%180, %c0_45] : memref<64x64xf32, #tpu.memory_space<vmem>>, vector<8x64xf32>
    tpu.vector_store %arg11[%180, %c0_45], %179 {strides = array<i32>} : memref<64x64xf32, #tpu.memory_space<vmem>>, vector<8x64xf32>,
    %c5_i32 = arith.constant 5 : i32
    %c8_i32_46 = arith.constant 8 : i32
    %182 = arith.muli %c5_i32, %c8_i32_46 : i32
    %183 = tpu.assume_multiple %182, 8 : i32
    %cst_47 = arith.constant dense<0.000000e+00> : vector<8x192xf32>
    %184 = tpu.matmul %179, %7, %cst_47 {dimension_numbers = #tpu.dot_dimension_numbers<[1], [0], [0], [1], [0, 0, 1, 1], [], []>} : vector<8x64xf32>, vector<64x192xf32>, vector<8x192xf32> -> vector<8x192xf32>
    %185 = arith.index_cast %183 : i32 to index
    %c0_48 = arith.constant 0 : index
    %186 = vector.load %arg10[%185, %c0_48] : memref<64x192xf32, #tpu.memory_space<vmem>>, vector<8x192xf32>
    %187 = vector.extract_strided_slice %186 {offsets = [0, 0], sizes = [8, 64], strides = [1, 1]} : vector<8x192xf32> to vector<8x64xf32>
    %188 = vector.extract_strided_slice %184 {offsets = [0, 0], sizes = [8, 64], strides = [1, 1]} : vector<8x192xf32> to vector<8x64xf32>
    %189 = arith.addf %187, %188 : vector<8x64xf32>
    %190 = arith.negf %189 : vector<8x64xf32>
    %191 = math.exp %190 : vector<8x64xf32>
    %cst_49 = arith.constant 1.000000e+00 : f32
    %192 = vector.broadcast %cst_49 : f32 to vector<8x64xf32>
    %193 = arith.addf %192, %191 : vector<8x64xf32>
    %194 = arith.divf %192, %193 : vector<8x64xf32>
    %195 = vector.extract_strided_slice %186 {offsets = [0, 64], sizes = [8, 64], strides = [1, 1]} : vector<8x192xf32> to vector<8x64xf32>
    %196 = vector.extract_strided_slice %184 {offsets = [0, 64], sizes = [8, 64], strides = [1, 1]} : vector<8x192xf32> to vector<8x64xf32>
    %197 = arith.addf %195, %196 : vector<8x64xf32>
    %198 = arith.negf %197 : vector<8x64xf32>
    %199 = math.exp %198 : vector<8x64xf32>
    %cst_50 = arith.constant 1.000000e+00 : f32
    %200 = vector.broadcast %cst_50 : f32 to vector<8x64xf32>
    %201 = arith.addf %200, %199 : vector<8x64xf32>
    %202 = arith.divf %200, %201 : vector<8x64xf32>
    %203 = vector.extract_strided_slice %186 {offsets = [0, 128], sizes = [8, 64], strides = [1, 1]} : vector<8x192xf32> to vector<8x64xf32>
    %204 = vector.extract_strided_slice %184 {offsets = [0, 128], sizes = [8, 64], strides = [1, 1]} : vector<8x192xf32> to vector<8x64xf32>
    %205 = arith.addf %204, %10 : vector<8x64xf32>
    %206 = arith.mulf %194, %205 : vector<8x64xf32>
    %207 = arith.addf %203, %206 : vector<8x64xf32>
    %208 = math.tanh %207 : vector<8x64xf32>
    %cst_51 = arith.constant 1.000000e+00 : f32
    %209 = vector.broadcast %cst_51 : f32 to vector<8x64xf32>
    %210 = arith.subf %209, %202 : vector<8x64xf32>
    %211 = arith.mulf %210, %208 : vector<8x64xf32>
    %212 = arith.mulf %202, %179 : vector<8x64xf32>
    %213 = arith.addf %211, %212 : vector<8x64xf32>
    %214 = arith.index_cast %183 : i32 to index
    %c0_52 = arith.constant 0 : index
    %215 = vector.load %arg11[%214, %c0_52] : memref<64x64xf32, #tpu.memory_space<vmem>>, vector<8x64xf32>
    tpu.vector_store %arg11[%214, %c0_52], %213 {strides = array<i32>} : memref<64x64xf32, #tpu.memory_space<vmem>>, vector<8x64xf32>,
    %c6_i32 = arith.constant 6 : i32
    %c8_i32_53 = arith.constant 8 : i32
    %216 = arith.muli %c6_i32, %c8_i32_53 : i32
    %217 = tpu.assume_multiple %216, 8 : i32
    %cst_54 = arith.constant dense<0.000000e+00> : vector<8x192xf32>
    %218 = tpu.matmul %213, %7, %cst_54 {dimension_numbers = #tpu.dot_dimension_numbers<[1], [0], [0], [1], [0, 0, 1, 1], [], []>} : vector<8x64xf32>, vector<64x192xf32>, vector<8x192xf32> -> vector<8x192xf32>
    %219 = arith.index_cast %217 : i32 to index
    %c0_55 = arith.constant 0 : index
    %220 = vector.load %arg10[%219, %c0_55] : memref<64x192xf32, #tpu.memory_space<vmem>>, vector<8x192xf32>
    %221 = vector.extract_strided_slice %220 {offsets = [0, 0], sizes = [8, 64], strides = [1, 1]} : vector<8x192xf32> to vector<8x64xf32>
    %222 = vector.extract_strided_slice %218 {offsets = [0, 0], sizes = [8, 64], strides = [1, 1]} : vector<8x192xf32> to vector<8x64xf32>
    %223 = arith.addf %221, %222 : vector<8x64xf32>
    %224 = arith.negf %223 : vector<8x64xf32>
    %225 = math.exp %224 : vector<8x64xf32>
    %cst_56 = arith.constant 1.000000e+00 : f32
    %226 = vector.broadcast %cst_56 : f32 to vector<8x64xf32>
    %227 = arith.addf %226, %225 : vector<8x64xf32>
    %228 = arith.divf %226, %227 : vector<8x64xf32>
    %229 = vector.extract_strided_slice %220 {offsets = [0, 64], sizes = [8, 64], strides = [1, 1]} : vector<8x192xf32> to vector<8x64xf32>
    %230 = vector.extract_strided_slice %218 {offsets = [0, 64], sizes = [8, 64], strides = [1, 1]} : vector<8x192xf32> to vector<8x64xf32>
    %231 = arith.addf %229, %230 : vector<8x64xf32>
    %232 = arith.negf %231 : vector<8x64xf32>
    %233 = math.exp %232 : vector<8x64xf32>
    %cst_57 = arith.constant 1.000000e+00 : f32
    %234 = vector.broadcast %cst_57 : f32 to vector<8x64xf32>
    %235 = arith.addf %234, %233 : vector<8x64xf32>
    %236 = arith.divf %234, %235 : vector<8x64xf32>
    %237 = vector.extract_strided_slice %220 {offsets = [0, 128], sizes = [8, 64], strides = [1, 1]} : vector<8x192xf32> to vector<8x64xf32>
    %238 = vector.extract_strided_slice %218 {offsets = [0, 128], sizes = [8, 64], strides = [1, 1]} : vector<8x192xf32> to vector<8x64xf32>
    %239 = arith.addf %238, %10 : vector<8x64xf32>
    %240 = arith.mulf %228, %239 : vector<8x64xf32>
    %241 = arith.addf %237, %240 : vector<8x64xf32>
    %242 = math.tanh %241 : vector<8x64xf32>
    %cst_58 = arith.constant 1.000000e+00 : f32
    %243 = vector.broadcast %cst_58 : f32 to vector<8x64xf32>
    %244 = arith.subf %243, %236 : vector<8x64xf32>
    %245 = arith.mulf %244, %242 : vector<8x64xf32>
    %246 = arith.mulf %236, %213 : vector<8x64xf32>
    %247 = arith.addf %245, %246 : vector<8x64xf32>
    %248 = arith.index_cast %217 : i32 to index
    %c0_59 = arith.constant 0 : index
    %249 = vector.load %arg11[%248, %c0_59] : memref<64x64xf32, #tpu.memory_space<vmem>>, vector<8x64xf32>
    tpu.vector_store %arg11[%248, %c0_59], %247 {strides = array<i32>} : memref<64x64xf32, #tpu.memory_space<vmem>>, vector<8x64xf32>,
    %c7_i32 = arith.constant 7 : i32
    %c8_i32_60 = arith.constant 8 : i32
    %250 = arith.muli %c7_i32, %c8_i32_60 : i32
    %251 = tpu.assume_multiple %250, 8 : i32
    %cst_61 = arith.constant dense<0.000000e+00> : vector<8x192xf32>
    %252 = tpu.matmul %247, %7, %cst_61 {dimension_numbers = #tpu.dot_dimension_numbers<[1], [0], [0], [1], [0, 0, 1, 1], [], []>} : vector<8x64xf32>, vector<64x192xf32>, vector<8x192xf32> -> vector<8x192xf32>
    %253 = arith.index_cast %251 : i32 to index
    %c0_62 = arith.constant 0 : index
    %254 = vector.load %arg10[%253, %c0_62] : memref<64x192xf32, #tpu.memory_space<vmem>>, vector<8x192xf32>
    %255 = vector.extract_strided_slice %254 {offsets = [0, 0], sizes = [8, 64], strides = [1, 1]} : vector<8x192xf32> to vector<8x64xf32>
    %256 = vector.extract_strided_slice %252 {offsets = [0, 0], sizes = [8, 64], strides = [1, 1]} : vector<8x192xf32> to vector<8x64xf32>
    %257 = arith.addf %255, %256 : vector<8x64xf32>
    %258 = arith.negf %257 : vector<8x64xf32>
    %259 = math.exp %258 : vector<8x64xf32>
    %cst_63 = arith.constant 1.000000e+00 : f32
    %260 = vector.broadcast %cst_63 : f32 to vector<8x64xf32>
    %261 = arith.addf %260, %259 : vector<8x64xf32>
    %262 = arith.divf %260, %261 : vector<8x64xf32>
    %263 = vector.extract_strided_slice %254 {offsets = [0, 64], sizes = [8, 64], strides = [1, 1]} : vector<8x192xf32> to vector<8x64xf32>
    %264 = vector.extract_strided_slice %252 {offsets = [0, 64], sizes = [8, 64], strides = [1, 1]} : vector<8x192xf32> to vector<8x64xf32>
    %265 = arith.addf %263, %264 : vector<8x64xf32>
    %266 = arith.negf %265 : vector<8x64xf32>
    %267 = math.exp %266 : vector<8x64xf32>
    %cst_64 = arith.constant 1.000000e+00 : f32
    %268 = vector.broadcast %cst_64 : f32 to vector<8x64xf32>
    %269 = arith.addf %268, %267 : vector<8x64xf32>
    %270 = arith.divf %268, %269 : vector<8x64xf32>
    %271 = vector.extract_strided_slice %254 {offsets = [0, 128], sizes = [8, 64], strides = [1, 1]} : vector<8x192xf32> to vector<8x64xf32>
    %272 = vector.extract_strided_slice %252 {offsets = [0, 128], sizes = [8, 64], strides = [1, 1]} : vector<8x192xf32> to vector<8x64xf32>
    %273 = arith.addf %272, %10 : vector<8x64xf32>
    %274 = arith.mulf %262, %273 : vector<8x64xf32>
    %275 = arith.addf %271, %274 : vector<8x64xf32>
    %276 = math.tanh %275 : vector<8x64xf32>
    %cst_65 = arith.constant 1.000000e+00 : f32
    %277 = vector.broadcast %cst_65 : f32 to vector<8x64xf32>
    %278 = arith.subf %277, %270 : vector<8x64xf32>
    %279 = arith.mulf %278, %276 : vector<8x64xf32>
    %280 = arith.mulf %270, %247 : vector<8x64xf32>
    %281 = arith.addf %279, %280 : vector<8x64xf32>
    %282 = arith.index_cast %251 : i32 to index
    %c0_66 = arith.constant 0 : index
    %283 = vector.load %arg11[%282, %c0_66] : memref<64x64xf32, #tpu.memory_space<vmem>>, vector<8x64xf32>
    tpu.vector_store %arg11[%282, %c0_66], %281 {strides = array<i32>} : memref<64x64xf32, #tpu.memory_space<vmem>>, vector<8x64xf32>,
    %c8_i32_67 = arith.constant 8 : i32
    %c0_68 = arith.constant 0 : index
    %c0_69 = arith.constant 0 : index
    %284 = vector.load %arg11[%c0_68, %c0_69] : memref<64x64xf32, #tpu.memory_space<vmem>>, vector<64x64xf32>
    %c0_70 = arith.constant 0 : index
    %c0_71 = arith.constant 0 : index
    %285 = vector.load %arg5[%c0_70, %c0_71] : memref<64x32xf32, #tpu.memory_space<vmem>>, vector<64x32xf32>
    %cst_72 = arith.constant dense<0.000000e+00> : vector<64x32xf32>
    %286 = tpu.matmul %284, %285, %cst_72 {dimension_numbers = #tpu.dot_dimension_numbers<[1], [0], [0], [1], [0, 0, 1, 1], [], []>} : vector<64x64xf32>, vector<64x32xf32>, vector<64x32xf32> -> vector<64x32xf32>
    %c0_73 = arith.constant 0 : index
    %c0_74 = arith.constant 0 : index
    %287 = vector.load %arg6[%c0_73, %c0_74] : memref<1x32xf32, #tpu.memory_space<vmem>>, vector<1x32xf32>
    %288 = vector.broadcast %287 : vector<1x32xf32> to vector<64x32xf32>
    %289 = arith.addf %286, %288 : vector<64x32xf32>
    %cst_75 = arith.constant 0.000000e+00 : f32
    %290 = vector.broadcast %cst_75 : f32 to vector<64x32xf32>
    %291 = arith.maximumf %289, %290 : vector<64x32xf32>
    %c0_76 = arith.constant 0 : index
    %c0_77 = arith.constant 0 : index
    %292 = vector.load %arg7[%c0_76, %c0_77] : memref<32x128xf32, #tpu.memory_space<vmem>>, vector<32x128xf32>
    %cst_78 = arith.constant dense<0.000000e+00> : vector<64x128xf32>
    %293 = tpu.matmul %291, %292, %cst_78 {dimension_numbers = #tpu.dot_dimension_numbers<[1], [0], [0], [1], [0, 0, 1, 1], [], []>} : vector<64x32xf32>, vector<32x128xf32>, vector<64x128xf32> -> vector<64x128xf32>
    %c0_79 = arith.constant 0 : index
    %c0_80 = arith.constant 0 : index
    %294 = vector.load %arg8[%c0_79, %c0_80] : memref<1x128xf32, #tpu.memory_space<vmem>>, vector<1x128xf32>
    %295 = vector.broadcast %294 : vector<1x128xf32> to vector<64x128xf32>
    %296 = arith.addf %293, %295 : vector<64x128xf32>
    %c0_81 = arith.constant 0 : index
    %c0_82 = arith.constant 0 : index
    %297 = vector.load %arg9[%c0_81, %c0_82] : memref<64x128xf32, #tpu.memory_space<vmem>>, vector<64x128xf32>
    tpu.vector_store %arg9[%c0_81, %c0_82], %296 {strides = array<i32>} : memref<64x128xf32, #tpu.memory_space<vmem>>, vector<64x128xf32>,
    return
  }
}

</mosaic_0001>

<llo_original>
// kernel: tpu_custom_call.1
$region0: #{tpu_custom_call.1}
  #allocation0 [shape = 'u32[]', space=smem, size = 0x4, offset = 0x4, fixed_abs, tag = 'smem constant byte address 0x4 - core index']
  #allocation1 [shape = 'u32[144,128]{1,0:T(1,128)}', space=vmem, size = 0x12000, scoped, tag = 'internal scratch']
  #allocation2 [shape = 'f32[64,192]{1,0:T(8,128)}', space=vmem, size = 0x10000, scoped, tag = 'scratch operand']
  #allocation3 [shape = 'f32[64,64]{1,0:T(8,128)}', space=vmem, size = 0x8000, scoped, tag = 'scratch operand']
  %s0 = inlined_call_operand.vmem [shape: f32[64,16], index: 0, kind: input, shape index: {}]
  %s1 = inlined_call_operand.hbm [shape: f32[16,192], index: 1, kind: input, shape index: {}]
  %s2 = inlined_call_operand.vmem [shape: f32[1,192], index: 2, kind: input, shape index: {}]
  %s3 = inlined_call_operand.vmem [shape: f32[64,192], index: 3, kind: input, shape index: {}]
  %s4 = inlined_call_operand.hbm [shape: f32[1,64], index: 4, kind: input, shape index: {}]
  %s5 = inlined_call_operand.vmem [shape: f32[64,32], index: 5, kind: input, shape index: {}]
  %s6 = inlined_call_operand.vmem [shape: f32[1,32], index: 6, kind: input, shape index: {}]
  %s7 = inlined_call_operand.vmem [shape: f32[32,128], index: 7, kind: input, shape index: {}]
  %s8 = inlined_call_operand.vmem [shape: f32[1,128], index: 8, kind: input, shape index: {}]
  %s9 = inlined_call_operand.hbm [shape: f32[64,128], index: 9, kind: output, shape index: {}]
  %s10 = sld [smem:[#allocation0]]
  $region54: #{tpu_custom_call.1} parent=0
    _
  %s12 = ssub.s32 1, %s10
  %s13 = scalar_select 0, %s12, %s10
  $region1: #{tpu_custom_call.1} parent=0
    #allocation4 [shape = 'u8[16384]{0}', space=vmem, size = 0x4000, scoped, tag = 'input window, operand 1, single buffered']
    #allocation5 [shape = 's32[1]{0}', space=sflag, size = 0x4, scoped, tag = 'scoped memory for tpu_custom_call.1']
    #allocation6 [shape = 's32[1]{0}', space=sflag, size = 0x4, scoped, tag = 'scoped memory for tpu_custom_call.1']
    #allocation7 [shape = 'u8[512]{0}', space=vmem, size = 0x400, scoped, tag = 'input window, operand 4, single buffered']
    #allocation8 [shape = 's32[1]{0}', space=sflag, size = 0x4, scoped, tag = 'scoped memory for tpu_custom_call.1']
    #allocation9 [shape = 'u8[32768]{0}', space=vmem, size = 0x8000, scoped, tag = 'output window, operand 0, single buffered']
    %14 = vsyncpa [#allocation5], 0
    %15 = vsyncpa [#allocation8], 0
    %16 = vsyncpa [#allocation6], 0
    // Predicated region
    $region2: #{tpu_custom_call.1} parent=1 // pred_check
      _
    $region3: #{tpu_custom_call.1} parent=1 // pred_check_branch
      %18 = sbr.rel (0) target = $region5
    $region4: #{tpu_custom_call.1} parent=1 // pred_region
      _
    $region5: #{tpu_custom_call.1} parent=1 // pred_fallthru
      _
    // Predicated region
    $region6: #{tpu_custom_call.1} parent=1 // pred_check
      _
    $region7: #{tpu_custom_call.1} parent=1 // pred_check_branch
      %20 = sbr.rel (0) target = $region9
    $region8: #{tpu_custom_call.1} parent=1 // pred_region
      %s22 = ssub.s32 512, 512
      %23 = vsyncadd [#allocation5], %s22
      %s24 = sshll.u32 [#allocation4], 4
      %s25 = int_to_ptr.vmem [resolvable:$true] %s24
      %30 = dma.hbm_to_vmem [thread:$0]  %s1, 512, %s25, [#allocation5], 256, 256, 16
    $region9: #{tpu_custom_call.1} parent=1 // pred_fallthru
      _
    // Predicated region
    $region10: #{tpu_custom_call.1} parent=1 // pred_check
      _
    $region11: #{tpu_custom_call.1} parent=1 // pred_check_branch
      %32 = sbr.rel (0) target = $region13
    $region12: #{tpu_custom_call.1} parent=1 // pred_region
      _
    $region13: #{tpu_custom_call.1} parent=1 // pred_fallthru
      _
    // Predicated region
    $region14: #{tpu_custom_call.1} parent=1 // pred_check
      _
    $region15: #{tpu_custom_call.1} parent=1 // pred_check_branch
      %34 = sbr.rel (0) target = $region17
    $region16: #{tpu_custom_call.1} parent=1 // pred_region
      _
    $region17: #{tpu_custom_call.1} parent=1 // pred_fallthru
      _
    // Predicated region
    $region18: #{tpu_custom_call.1} parent=1 // pred_check
      _
    $region19: #{tpu_custom_call.1} parent=1 // pred_check_branch
      %36 = sbr.rel (0) target = $region21
    $region20: #{tpu_custom_call.1} parent=1 // pred_region
      %s38 = ssub.s32 16, 16
      %39 = vsyncadd [#allocation8], %s38
      %s41 = sshll.u32 [#allocation7], 4
      %s42 = int_to_ptr.vmem [resolvable:$true] %s41
      %44 = dma.hbm_to_vmem [thread:$0]  %s4, 16, %s42, [#allocation8]
    $region21: #{tpu_custom_call.1} parent=1 // pred_fallthru
      _
    // Predicated region
    $region22: #{tpu_custom_call.1} parent=1 // pred_check
      _
    $region23: #{tpu_custom_call.1} parent=1 // pred_check_branch
      %46 = sbr.rel (0) target = $region25
    $region24: #{tpu_custom_call.1} parent=1 // pred_region
      _
    $region25: #{tpu_custom_call.1} parent=1 // pred_fallthru
      _
    // Predicated region
    $region26: #{tpu_custom_call.1} parent=1 // pred_check
      _
    $region27: #{tpu_custom_call.1} parent=1 // pred_check_branch
      %48 = sbr.rel (0) target = $region29
    $region28: #{tpu_custom_call.1} parent=1 // pred_region
      _
    $region29: #{tpu_custom_call.1} parent=1 // pred_fallthru
      _
    // Predicated region
    $region30: #{tpu_custom_call.1} parent=1 // pred_check
      _
    $region31: #{tpu_custom_call.1} parent=1 // pred_check_branch
      %50 = sbr.rel (0) target = $region33
    $region32: #{tpu_custom_call.1} parent=1 // pred_region
      _
    $region33: #{tpu_custom_call.1} parent=1 // pred_fallthru
      _
    // Predicated region
    $region34: #{tpu_custom_call.1} parent=1 // pred_check
      _
    $region35: #{tpu_custom_call.1} parent=1 // pred_check_branch
      %52 = sbr.rel (0) target = $region37
    $region36: #{tpu_custom_call.1} parent=1 // pred_region
      _
    $region37: #{tpu_custom_call.1} parent=1 // pred_fallthru
      _
    // Predicated region
    $region38: #{tpu_custom_call.1} parent=1 // pred_check
      _
    $region39: #{tpu_custom_call.1} parent=1 // pred_check_branch
      %54 = sbr.rel (0) target = $region41
    $region40: #{tpu_custom_call.1} parent=1 // pred_region
      %55 = dma.done [#allocation5], 512
    $region41: #{tpu_custom_call.1} parent=1 // pred_fallthru
      _
    // Predicated region
    $region42: #{tpu_custom_call.1} parent=1 // pred_check
      _
    $region43: #{tpu_custom_call.1} parent=1 // pred_check_branch
      %57 = sbr.rel (0) target = $region45
    $region44: #{tpu_custom_call.1} parent=1 // pred_region
      %58 = dma.done [#allocation8], 16
    $region45: #{tpu_custom_call.1} parent=1 // pred_fallthru
      _
    %v59 = vld [vmem:[%s0] sm:$0xff]
    %v60 = vld [vmem:[%s0 + $0x8] sm:$0xff]
    %v61 = vld [vmem:[%s0 + $0x10] sm:$0xff]
    %v62 = vld [vmem:[%s0 + $0x18] sm:$0xff]
    %v63 = vld [vmem:[%s0 + $0x20] sm:$0xff]
    %v64 = vld [vmem:[%s0 + $0x28] sm:$0xff]
    %v65 = vld [vmem:[%s0 + $0x30] sm:$0xff]
    %v66 = vld [vmem:[%s0 + $0x38] sm:$0xff]
    %v67 = vld [vmem:[#allocation4] sm:$0xff]
    %v68 = vld [vmem:[#allocation4 + $0x8] sm:$0xff]
    %v69 = vld [vmem:[#allocation4 + $0x10] sm:$0xff]
    %v70 = vld [vmem:[#allocation4 + $0x18] sm:$0xff]
    %v71 = vld [vmem:[%s2] sm:$0x3]
    %v73 = vlaneseq
    %v74 = vshrl.u32 %v73, 7
    %v75 = vsub.s32 0, %v74
    %v76 = vrot.slane %v71, %v75
    %v77 = vlaneseq
    %v78 = vshrl.u32 %v77, 7
    %v79 = vsub.s32 1, %v78
    %v80 = vrot.slane %v71, %v79
    %vm83 = vcmask 130048
    %v85 = vsel %vm83, %v59, 0
    %v88 = vsel %vm83, %v60, 0
    %v91 = vsel %vm83, %v61, 0
    %v94 = vsel %vm83, %v62, 0
    %v97 = vsel %vm83, %v63, 0
    %v100 = vsel %vm83, %v64, 0
    %v103 = vsel %vm83, %v65, 0
    %v106 = vsel %vm83, %v66, 0
    %108 = vmatprep.subr.mxu0 %v68
    %109 = vmatpush1.msra.mxu0 %v67
    %110 = vmatprep.subr.mxu0 %v70
    %111 = vmatpush1.msra.mxu0 %v69
    %112 = vmatprep.subr.mxu0 0.0
    %113 = vmatpush1.msra.mxu0 0.0
    %114 = vmatprep.subr.mxu0 0.0
    %115 = vmatpush1.msra.mxu0 0.0
    %116 = vmatprep.subr.mxu0 0.0
    %117 = vmatpush1.msra.mxu0 0.0
    %118 = vmatprep.subr.mxu0 0.0
    %119 = vmatpush1.msra.mxu0 0.0
    %120 = vmatprep.subr.mxu0 0.0
    %121 = vmatpush1.msra.mxu0 0.0
    %122 = vmatprep.subr.mxu0 0.0
    %123 = vmatpush1.msra.mxu0 0.0
    %124 = vmatprep.subr.mxu0 0.0
    %125 = vmatpush1.msra.mxu0 0.0
    %126 = vmatprep.subr.mxu0 0.0
    %127 = vmatpush1.msra.mxu0 0.0
    %128 = vmatprep.subr.mxu0 0.0
    %129 = vmatpush1.msra.mxu0 0.0
    %130 = vmatprep.subr.mxu0 0.0
    %131 = vmatpush1.msra.mxu0 0.0
    %132 = vmatprep.subr.mxu0 0.0
    %133 = vmatpush1.msra.mxu0 0.0
    %134 = vmatprep.subr.mxu0 0.0
    %135 = vmatpush1.msra.mxu0 0.0
    %136 = vmatprep.subr.mxu0 0.0
    %137 = vmatpush1.msra.mxu0 0.0
    %138 = vmatprep.subr.mxu0 0.0
    %139 = vmatpush1.msra.mxu0 0.0
    %140 = vmatprep.subr.mxu0 0.0
    %141 = vmatpush1.msra.mxu0 0.0
    %142 = vmatprep.subr.mxu0 0.0
    %143 = vmatpush1.msra.mxu0 0.0
    %144 = vmatprep.subr.mxu0 0.0
    %145 = vmatpush1.msra.mxu0 0.0
    %146 = vmatprep.subr.mxu0 0.0
    %147 = vmatpush1.msra.mxu0 0.0
    %148 = vmatprep.subr.mxu0 0.0
    %149 = vmatpush1.msra.mxu0 0.0
    %150 = vmatprep.subr.mxu0 0.0
    %151 = vmatpush1.msra.mxu0 0.0
    %152 = vmatprep.subr.mxu0 0.0
    %153 = vmatpush1.msra.mxu0 0.0
    %154 = vmatprep.subr.mxu0 0.0
    %155 = vmatpush1.msra.mxu0 0.0
    %156 = vmatprep.subr.mxu0 0.0
    %157 = vmatpush1.msra.mxu0 0.0
    %158 = vmatprep.subr.mxu0 0.0
    %159 = vmatpush1.msra.mxu0 0.0
    %160 = vmatprep.subr.mxu0 0.0
    %161 = vmatpush1.msra.mxu0 0.0
    %162 = vmatprep.subr.mxu0 0.0
    %163 = vmatpush1.msra.mxu0 0.0
    %164 = vmatprep.subr.mxu0 0.0
    %165 = vmatpush1.msra.mxu0 0.0
    %166 = vmatprep.subr.mxu0 0.0
    %167 = vmatpush1.msra.mxu0 0.0
    %168 = vmatprep.subr.mxu0 0.0
    %169 = vmatpush1.msra.mxu0 0.0
    %170 = vmatprep.subr.mxu0 0.0
    %171 = vmatpush1.msra.mxu0 0.0
    %172 = vmatprep.mubr.f32.mxu0 0.0
    %173 = vmatmul.mubr.f32.gmra.mrb[0].mxu0 %v85
    %v174 = vpop.f32.mrb[0].mxu0
    %v175 = vadd.f32 %v76, %v174
    %v176 = vpop.f32.mrb[0].mxu0
    %v177 = vadd.f32 %v80, %v176
    %178 = vmatprep.mubr.f32.mxu0 0.0
    %179 = vmatmul.mubr.f32.gmra.mrb[0].mxu0 %v88
    %v180 = vpop.f32.mrb[0].mxu0
    %v181 = vadd.f32 %v76, %v180
    %v182 = vpop.f32.mrb[0].mxu0
    %v183 = vadd.f32 %v80, %v182
    %184 = vmatprep.mubr.f32.mxu0 0.0
    %185 = vmatmul.mubr.f32.gmra.mrb[0].mxu0 %v91
    %v186 = vpop.f32.mrb[0].mxu0
    %v187 = vadd.f32 %v76, %v186
    %v188 = vpop.f32.mrb[0].mxu0
    %v189 = vadd.f32 %v80, %v188
    %190 = vmatprep.mubr.f32.mxu0 0.0
    %191 = vmatmul.mubr.f32.gmra.mrb[0].mxu0 %v94
    %v192 = vpop.f32.mrb[0].mxu0
    %v193 = vadd.f32 %v76, %v192
    %v194 = vpop.f32.mrb[0].mxu0
    %v195 = vadd.f32 %v80, %v194
    %196 = vmatprep.mubr.f32.mxu0 0.0
    %197 = vmatmul.mubr.f32.gmra.mrb[0].mxu0 %v97
    %v198 = vpop.f32.mrb[0].mxu0
    %v199 = vadd.f32 %v76, %v198
    %v200 = vpop.f32.mrb[0].mxu0
    %v201 = vadd.f32 %v80, %v200
    %202 = vmatprep.mubr.f32.mxu0 0.0
    %203 = vmatmul.mubr.f32.gmra.mrb[0].mxu0 %v100
    %v204 = vpop.f32.mrb[0].mxu0
    %v205 = vadd.f32 %v76, %v204
    %v206 = vpop.f32.mrb[0].mxu0
    %v207 = vadd.f32 %v80, %v206
    %208 = vmatprep.mubr.f32.mxu0 0.0
    %209 = vmatmul.mubr.f32.gmra.mrb[0].mxu0 %v103
    %v210 = vpop.f32.mrb[0].mxu0
    %v211 = vadd.f32 %v76, %v210
    %v212 = vpop.f32.mrb[0].mxu0
    %v213 = vadd.f32 %v80, %v212
    %214 = vmatprep.mubr.f32.mxu0 0.0
    %215 = vmatmul.mubr.f32.gmra.mrb[0].mxu0 %v106
    %v216 = vpop.f32.mrb[0].mxu0
    %v217 = vadd.f32 %v76, %v216
    %v218 = vpop.f32.mrb[0].mxu0
    %v219 = vadd.f32 %v80, %v218
    %220 = vdwg.mxu0
    %221 = vst [vmem:[#allocation2] sm:$0xff] %v175
    %vm222 = vcmask 523264
    %223 = vst.msk [vmem:[#allocation2 + $0x8] sm:$0xff] %vm222, %v177
    %224 = vst [vmem:[#allocation2 + $0x10] sm:$0xff] %v181
    %225 = vst.msk [vmem:[#allocation2 + $0x18] sm:$0xff] %vm222, %v183
    %226 = vst [vmem:[#allocation2 + $0x20] sm:$0xff] %v187
    %227 = vst.msk [vmem:[#allocation2 + $0x28] sm:$0xff] %vm222, %v189
    %228 = vst [vmem:[#allocation2 + $0x30] sm:$0xff] %v193
    %229 = vst.msk [vmem:[#allocation2 + $0x38] sm:$0xff] %vm222, %v195
    %230 = vst [vmem:[#allocation2 + $0x40] sm:$0xff] %v199
    %231 = vst.msk [vmem:[#allocation2 + $0x48] sm:$0xff] %vm222, %v201
    %232 = vst [vmem:[#allocation2 + $0x50] sm:$0xff] %v205
    %233 = vst.msk [vmem:[#allocation2 + $0x58] sm:$0xff] %vm222, %v207
    %234 = vst [vmem:[#allocation2 + $0x60] sm:$0xff] %v211
    %235 = vst.msk [vmem:[#allocation2 + $0x68] sm:$0xff] %vm222, %v213
    %236 = vst [vmem:[#allocation2 + $0x70] sm:$0xff] %v217
    %237 = vst.msk [vmem:[#allocation2 + $0x78] sm:$0xff] %vm222, %v219
    %v238 = vld [vmem:[%s3] sm:$0xff]
    %v239 = vld [vmem:[%s3 + $0x8] sm:$0xff]
    %v240 = vld [vmem:[%s3 + $0x10] sm:$0xff]
    %v241 = vld [vmem:[%s3 + $0x18] sm:$0xff]
    %v242 = vld [vmem:[%s3 + $0x20] sm:$0xff]
    %v243 = vld [vmem:[%s3 + $0x28] sm:$0xff]
    %v244 = vld [vmem:[%s3 + $0x30] sm:$0xff]
    %v245 = vld [vmem:[%s3 + $0x38] sm:$0xff]
    %v246 = vld [vmem:[%s3 + $0x40] sm:$0xff]
    %v247 = vld [vmem:[%s3 + $0x48] sm:$0xff]
    %v248 = vld [vmem:[%s3 + $0x50] sm:$0xff]
    %v249 = vld [vmem:[%s3 + $0x58] sm:$0xff]
    %v250 = vld [vmem:[%s3 + $0x60] sm:$0xff]
    %v251 = vld [vmem:[%s3 + $0x68] sm:$0xff]
    %v252 = vld [vmem:[%s3 + $0x70] sm:$0xff]
    %v253 = vld [vmem:[%s3 + $0x78] sm:$0xff]
    %v254 = vld [vmem:[#allocation7] sm:$0x1]
    %v256 = vlaneseq
    %v257 = vshrl.u32 %v256, 7
    %v258 = vsub.s32 0, %v257
    %v259 = vrot.slane %v254, %v258
    %v262 = vsel %vm222, 0.0, 0
    %264 = vmatprep.subr.mxu0 %v239
    %265 = vmatpush1.msra.mxu0 %v238
    %266 = vmatprep.subr.mxu0 %v241
    %267 = vmatpush1.msra.mxu0 %v240
    %268 = vmatprep.subr.mxu0 %v243
    %269 = vmatpush1.msra.mxu0 %v242
    %270 = vmatprep.subr.mxu0 %v245
    %271 = vmatpush1.msra.mxu0 %v244
    %272 = vmatprep.subr.mxu0 %v247
    %273 = vmatpush1.msra.mxu0 %v246
    %274 = vmatprep.subr.mxu0 %v249
    %275 = vmatpush1.msra.mxu0 %v248
    %276 = vmatprep.subr.mxu0 %v251
    %277 = vmatpush1.msra.mxu0 %v250
    %278 = vmatprep.subr.mxu0 %v253
    %279 = vmatpush1.msra.mxu0 %v252
    %280 = vmatprep.subr.mxu0 0.0
    %281 = vmatpush1.msra.mxu0 0.0
    %282 = vmatprep.subr.mxu0 0.0
    %283 = vmatpush1.msra.mxu0 0.0
    %284 = vmatprep.subr.mxu0 0.0
    %285 = vmatpush1.msra.mxu0 0.0
    %286 = vmatprep.subr.mxu0 0.0
    %287 = vmatpush1.msra.mxu0 0.0
    %288 = vmatprep.subr.mxu0 0.0
    %289 = vmatpush1.msra.mxu0 0.0
    %290 = vmatprep.subr.mxu0 0.0
    %291 = vmatpush1.msra.mxu0 0.0
    %292 = vmatprep.subr.mxu0 0.0
    %293 = vmatpush1.msra.mxu0 0.0
    %294 = vmatprep.subr.mxu0 0.0
    %295 = vmatpush1.msra.mxu0 0.0
    %296 = vmatprep.subr.mxu0 0.0
    %297 = vmatpush1.msra.mxu0 0.0
    %298 = vmatprep.subr.mxu0 0.0
    %299 = vmatpush1.msra.mxu0 0.0
    %300 = vmatprep.subr.mxu0 0.0
    %301 = vmatpush1.msra.mxu0 0.0
    %302 = vmatprep.subr.mxu0 0.0
    %303 = vmatpush1.msra.mxu0 0.0
    %304 = vmatprep.subr.mxu0 0.0
    %305 = vmatpush1.msra.mxu0 0.0
    %306 = vmatprep.subr.mxu0 0.0
    %307 = vmatpush1.msra.mxu0 0.0
    %308 = vmatprep.subr.mxu0 0.0
    %309 = vmatpush1.msra.mxu0 0.0
    %310 = vmatprep.subr.mxu0 0.0
    %311 = vmatpush1.msra.mxu0 0.0
    %312 = vmatprep.subr.mxu0 0.0
    %313 = vmatpush1.msra.mxu0 0.0
    %314 = vmatprep.subr.mxu0 0.0
    %315 = vmatpush1.msra.mxu0 0.0
    %316 = vmatprep.subr.mxu0 0.0
    %317 = vmatpush1.msra.mxu0 0.0
    %318 = vmatprep.subr.mxu0 0.0
    %319 = vmatpush1.msra.mxu0 0.0
    %320 = vmatprep.subr.mxu0 0.0
    %321 = vmatpush1.msra.mxu0 0.0
    %322 = vmatprep.subr.mxu0 0.0
    %323 = vmatpush1.msra.mxu0 0.0
    %324 = vmatprep.subr.mxu0 0.0
    %325 = vmatpush1.msra.mxu0 0.0
    %326 = vmatprep.subr.mxu0 0.0
    %327 = vmatpush1.msra.mxu0 0.0
    %328 = vmatprep.mubr.f32.mxu0 0.0
    %329 = vmatmul.mubr.f32.gmra.mrb[0].mxu0 %v262
    %v330 = vpop.f32.mrb[0].mxu0
    %v331 = vadd.f32 0.0, %v330
    %v332 = vpop.f32.mrb[0].mxu0
    %v333 = vadd.f32 0.0, %v332
    %334 = vdwg.mxu0
    %s335 = smul.u32 0, 2
    %s336 = smul.addr %s335, 8
    %s337 = scalar_lea.vmem [#allocation2], %s336
    %v338 = vld [vmem:[%s337] sm:$0xff]
    %v339 = vld [vmem:[%s337 + $0x8] sm:$0xff]
    %v340 = vadd.f32 %v338, %v331
    %v341 = vxor.u32 %v340, 2147483648
    %v342 = vmul.f32 %v341, 1.442695
    %v343 = vpow.pop %v342
    %v344 = vadd.f32 %v343, 1.0
    %v345 = vrcp.pop %v344
    %v346 = vmul.f32 1.0, %v345
    %v347 = vadd.f32 %v333, %v259
    %v348 = vmul.f32 %v346, %v347
    %v349 = vadd.f32 %v339, %v348
    %v350 = vtanh.pop %v349
    %v351 = vsub.f32 1.0, %v346
    %353 = vrot.lane.b32.xlu0 %v350, 64
    %v354 = vpop.permute.xlu0 %353
    %v356 = vmul.f32 %v351, %v354
    %v357 = vmul.f32 %v346, 0.0
    %v358 = vadd.f32 %v356, %v357
    %360 = vrot.lane.b32.xlu0 %v358, 64
    %v361 = vpop.permute.xlu0 %360
    %363 = vst.msk [vmem:[#allocation3] sm:$0xff] %vm222, %v361
    %v364 = vsel %vm222, %v361, 0
    %366 = vmatprep.subr.mxu0 %v239
    %367 = vmatpush1.msra.mxu0 %v238
    %368 = vmatprep.subr.mxu0 %v241
    %369 = vmatpush1.msra.mxu0 %v240
    %370 = vmatprep.subr.mxu0 %v243
    %371 = vmatpush1.msra.mxu0 %v242
    %372 = vmatprep.subr.mxu0 %v245
    %373 = vmatpush1.msra.mxu0 %v244
    %374 = vmatprep.subr.mxu0 %v247
    %375 = vmatpush1.msra.mxu0 %v246
    %376 = vmatprep.subr.mxu0 %v249
    %377 = vmatpush1.msra.mxu0 %v248
    %378 = vmatprep.subr.mxu0 %v251
    %379 = vmatpush1.msra.mxu0 %v250
    %380 = vmatprep.subr.mxu0 %v253
    %381 = vmatpush1.msra.mxu0 %v252
    %382 = vmatprep.subr.mxu0 0.0
    %383 = vmatpush1.msra.mxu0 0.0
    %384 = vmatprep.subr.mxu0 0.0
    %385 = vmatpush1.msra.mxu0 0.0
    %386 = vmatprep.subr.mxu0 0.0
    %387 = vmatpush1.msra.mxu0 0.0
    %388 = vmatprep.subr.mxu0 0.0
    %389 = vmatpush1.msra.mxu0 0.0
    %390 = vmatprep.subr.mxu0 0.0
    %391 = vmatpush1.msra.mxu0 0.0
    %392 = vmatprep.subr.mxu0 0.0
    %393 = vmatpush1.msra.mxu0 0.0
    %394 = vmatprep.subr.mxu0 0.0
    %395 = vmatpush1.msra.mxu0 0.0
    %396 = vmatprep.subr.mxu0 0.0
    %397 = vmatpush1.msra.mxu0 0.0
    %398 = vmatprep.subr.mxu0 0.0
    %399 = vmatpush1.msra.mxu0 0.0
    %400 = vmatprep.subr.mxu0 0.0
    %401 = vmatpush1.msra.mxu0 0.0
    %402 = vmatprep.subr.mxu0 0.0
    %403 = vmatpush1.msra.mxu0 0.0
    %404 = vmatprep.subr.mxu0 0.0
    %405 = vmatpush1.msra.mxu0 0.0
    %406 = vmatprep.subr.mxu0 0.0
    %407 = vmatpush1.msra.mxu0 0.0
    %408 = vmatprep.subr.mxu0 0.0
    %409 = vmatpush1.msra.mxu0 0.0
    %410 = vmatprep.subr.mxu0 0.0
    %411 = vmatpush1.msra.mxu0 0.0
    %412 = vmatprep.subr.mxu0 0.0
    %413 = vmatpush1.msra.mxu0 0.0
    %414 = vmatprep.subr.mxu0 0.0
    %415 = vmatpush1.msra.mxu0 0.0
    %416 = vmatprep.subr.mxu0 0.0
    %417 = vmatpush1.msra.mxu0 0.0
    %418 = vmatprep.subr.mxu0 0.0
    %419 = vmatpush1.msra.mxu0 0.0
    %420 = vmatprep.subr.mxu0 0.0
    %421 = vmatpush1.msra.mxu0 0.0
    %422 = vmatprep.subr.mxu0 0.0
    %423 = vmatpush1.msra.mxu0 0.0
    %424 = vmatprep.subr.mxu0 0.0
    %425 = vmatpush1.msra.mxu0 0.0
    %426 = vmatprep.subr.mxu0 0.0
    %427 = vmatpush1.msra.mxu0 0.0
    %428 = vmatprep.subr.mxu0 0.0
    %429 = vmatpush1.msra.mxu0 0.0
    %430 = vmatprep.mubr.f32.mxu0 0.0
    %431 = vmatmul.mubr.f32.gmra.mrb[0].mxu0 %v364
    %v432 = vpop.f32.mrb[0].mxu0
    %v433 = vadd.f32 0.0, %v432
    %v434 = vpop.f32.mrb[0].mxu0
    %v435 = vadd.f32 0.0, %v434
    %436 = vdwg.mxu0
    %s437 = smul.u32 1, 2
    %s438 = smul.addr %s437, 8
    %s439 = scalar_lea.vmem [#allocation2], %s438
    %v440 = vld [vmem:[%s439] sm:$0xff]
    %v441 = vld [vmem:[%s439 + $0x8] sm:$0xff]
    %v442 = vadd.f32 %v440, %v433
    %v443 = vxor.u32 %v442, 2147483648
    %v444 = vmul.f32 %v443, 1.442695
    %v445 = vpow.pop %v444
    %v446 = vadd.f32 %v445, 1.0
    %v447 = vrcp.pop %v446
    %v448 = vmul.f32 1.0, %v447
    %v449 = vadd.f32 %v435, %v259
    %v450 = vmul.f32 %v448, %v449
    %v451 = vadd.f32 %v441, %v450
    %v452 = vtanh.pop %v451
    %v453 = vsub.f32 1.0, %v448
    %455 = vrot.lane.b32.xlu0 %v452, 64
    %v456 = vpop.permute.xlu0 %455
    %v458 = vmul.f32 %v453, %v456
    %v459 = vmul.f32 %v448, %v358
    %v460 = vadd.f32 %v458, %v459
    %462 = vrot.lane.b32.xlu0 %v460, 64
    %v463 = vpop.permute.xlu0 %462
    %s465 = scalar_lea.vmem [#allocation3], 8
    %466 = vst.msk [vmem:[%s465] sm:$0xff] %vm222, %v463
    %v467 = vsel %vm222, %v463, 0
    %469 = vmatprep.subr.mxu0 %v239
    %470 = vmatpush1.msra.mxu0 %v238
    %471 = vmatprep.subr.mxu0 %v241
    %472 = vmatpush1.msra.mxu0 %v240
    %473 = vmatprep.subr.mxu0 %v243
    %474 = vmatpush1.msra.mxu0 %v242
    %475 = vmatprep.subr.mxu0 %v245
    %476 = vmatpush1.msra.mxu0 %v244
    %477 = vmatprep.subr.mxu0 %v247
    %478 = vmatpush1.msra.mxu0 %v246
    %479 = vmatprep.subr.mxu0 %v249
    %480 = vmatpush1.msra.mxu0 %v248
    %481 = vmatprep.subr.mxu0 %v251
    %482 = vmatpush1.msra.mxu0 %v250
    %483 = vmatprep.subr.mxu0 %v253
    %484 = vmatpush1.msra.mxu0 %v252
    %485 = vmatprep.subr.mxu0 0.0
    %486 = vmatpush1.msra.mxu0 0.0
    %487 = vmatprep.subr.mxu0 0.0
    %488 = vmatpush1.msra.mxu0 0.0
    %489 = vmatprep.subr.mxu0 0.0
    %490 = vmatpush1.msra.mxu0 0.0
    %491 = vmatprep.subr.mxu0 0.0
    %492 = vmatpush1.msra.mxu0 0.0
    %493 = vmatprep.subr.mxu0 0.0
    %494 = vmatpush1.msra.mxu0 0.0
    %495 = vmatprep.subr.mxu0 0.0
    %496 = vmatpush1.msra.mxu0 0.0
    %497 = vmatprep.subr.mxu0 0.0
    %498 = vmatpush1.msra.mxu0 0.0
    %499 = vmatprep.subr.mxu0 0.0
    %500 = vmatpush1.msra.mxu0 0.0
    %501 = vmatprep.subr.mxu0 0.0
    %502 = vmatpush1.msra.mxu0 0.0
    %503 = vmatprep.subr.mxu0 0.0
    %504 = vmatpush1.msra.mxu0 0.0
    %505 = vmatprep.subr.mxu0 0.0
    %506 = vmatpush1.msra.mxu0 0.0
    %507 = vmatprep.subr.mxu0 0.0
    %508 = vmatpush1.msra.mxu0 0.0
    %509 = vmatprep.subr.mxu0 0.0
    %510 = vmatpush1.msra.mxu0 0.0
    %511 = vmatprep.subr.mxu0 0.0
    %512 = vmatpush1.msra.mxu0 0.0
    %513 = vmatprep.subr.mxu0 0.0
    %514 = vmatpush1.msra.mxu0 0.0
    %515 = vmatprep.subr.mxu0 0.0
    %516 = vmatpush1.msra.mxu0 0.0
    %517 = vmatprep.subr.mxu0 0.0
    %518 = vmatpush1.msra.mxu0 0.0
    %519 = vmatprep.subr.mxu0 0.0
    %520 = vmatpush1.msra.mxu0 0.0
    %521 = vmatprep.subr.mxu0 0.0
    %522 = vmatpush1.msra.mxu0 0.0
    %523 = vmatprep.subr.mxu0 0.0
    %524 = vmatpush1.msra.mxu0 0.0
    %525 = vmatprep.subr.mxu0 0.0
    %526 = vmatpush1.msra.mxu0 0.0
    %527 = vmatprep.subr.mxu0 0.0
    %528 = vmatpush1.msra.mxu0 0.0
    %529 = vmatprep.subr.mxu0 0.0
    %530 = vmatpush1.msra.mxu0 0.0
    %531 = vmatprep.subr.mxu0 0.0
    %532 = vmatpush1.msra.mxu0 0.0
    %533 = vmatprep.mubr.f32.mxu0 0.0
    %534 = vmatmul.mubr.f32.gmra.mrb[0].mxu0 %v467
    %v535 = vpop.f32.mrb[0].mxu0
    %v536 = vadd.f32 0.0, %v535
    %v537 = vpop.f32.mrb[0].mxu0
    %v538 = vadd.f32 0.0, %v537
    %539 = vdwg.mxu0
    %s540 = smul.u32 2, 2
    %s541 = smul.addr %s540, 8
    %s542 = scalar_lea.vmem [#allocation2], %s541
    %v543 = vld [vmem:[%s542] sm:$0xff]
    %v544 = vld [vmem:[%s542 + $0x8] sm:$0xff]
    %v545 = vadd.f32 %v543, %v536
    %v546 = vxor.u32 %v545, 2147483648
    %v547 = vmul.f32 %v546, 1.442695
    %v548 = vpow.pop %v547
    %v549 = vadd.f32 %v548, 1.0
    %v550 = vrcp.pop %v549
    %v551 = vmul.f32 1.0, %v550
    %v552 = vadd.f32 %v538, %v259
    %v553 = vmul.f32 %v551, %v552
    %v554 = vadd.f32 %v544, %v553
    %v555 = vtanh.pop %v554
    %v556 = vsub.f32 1.0, %v551
    %558 = vrot.lane.b32.xlu0 %v555, 64
    %v559 = vpop.permute.xlu0 %558
    %v561 = vmul.f32 %v556, %v559
    %v562 = vmul.f32 %v551, %v460
    %v563 = vadd.f32 %v561, %v562
    %565 = vrot.lane.b32.xlu0 %v563, 64
    %v566 = vpop.permute.xlu0 %565
    %s568 = scalar_lea.vmem [#allocation3], 16
    %569 = vst.msk [vmem:[%s568] sm:$0xff] %vm222, %v566
    %v570 = vsel %vm222, %v566, 0
    %572 = vmatprep.subr.mxu0 %v239
    %573 = vmatpush1.msra.mxu0 %v238
    %574 = vmatprep.subr.mxu0 %v241
    %575 = vmatpush1.msra.mxu0 %v240
    %576 = vmatprep.subr.mxu0 %v243
    %577 = vmatpush1.msra.mxu0 %v242
    %578 = vmatprep.subr.mxu0 %v245
    %579 = vmatpush1.msra.mxu0 %v244
    %580 = vmatprep.subr.mxu0 %v247
    %581 = vmatpush1.msra.mxu0 %v246
    %582 = vmatprep.subr.mxu0 %v249
    %583 = vmatpush1.msra.mxu0 %v248
    %584 = vmatprep.subr.mxu0 %v251
    %585 = vmatpush1.msra.mxu0 %v250
    %586 = vmatprep.subr.mxu0 %v253
    %587 = vmatpush1.msra.mxu0 %v252
    %588 = vmatprep.subr.mxu0 0.0
    %589 = vmatpush1.msra.mxu0 0.0
    %590 = vmatprep.subr.mxu0 0.0
    %591 = vmatpush1.msra.mxu0 0.0
    %592 = vmatprep.subr.mxu0 0.0
    %593 = vmatpush1.msra.mxu0 0.0
    %594 = vmatprep.subr.mxu0 0.0
    %595 = vmatpush1.msra.mxu0 0.0
    %596 = vmatprep.subr.mxu0 0.0
    %597 = vmatpush1.msra.mxu0 0.0
    %598 = vmatprep.subr.mxu0 0.0
    %599 = vmatpush1.msra.mxu0 0.0
    %600 = vmatprep.subr.mxu0 0.0
    %601 = vmatpush1.msra.mxu0 0.0
    %602 = vmatprep.subr.mxu0 0.0
    %603 = vmatpush1.msra.mxu0 0.0
    %604 = vmatprep.subr.mxu0 0.0
    %605 = vmatpush1.msra.mxu0 0.0
    %606 = vmatprep.subr.mxu0 0.0
    %607 = vmatpush1.msra.mxu0 0.0
    %608 = vmatprep.subr.mxu0 0.0
    %609 = vmatpush1.msra.mxu0 0.0
    %610 = vmatprep.subr.mxu0 0.0
    %611 = vmatpush1.msra.mxu0 0.0
    %612 = vmatprep.subr.mxu0 0.0
    %613 = vmatpush1.msra.mxu0 0.0
    %614 = vmatprep.subr.mxu0 0.0
    %615 = vmatpush1.msra.mxu0 0.0
    %616 = vmatprep.subr.mxu0 0.0
    %617 = vmatpush1.msra.mxu0 0.0
    %618 = vmatprep.subr.mxu0 0.0
    %619 = vmatpush1.msra.mxu0 0.0
    %620 = vmatprep.subr.mxu0 0.0
    %621 = vmatpush1.msra.mxu0 0.0
    %622 = vmatprep.subr.mxu0 0.0
    %623 = vmatpush1.msra.mxu0 0.0
    %624 = vmatprep.subr.mxu0 0.0
    %625 = vmatpush1.msra.mxu0 0.0
    %626 = vmatprep.subr.mxu0 0.0
    %627 = vmatpush1.msra.mxu0 0.0
    %628 = vmatprep.subr.mxu0 0.0
    %629 = vmatpush1.msra.mxu0 0.0
    %630 = vmatprep.subr.mxu0 0.0
    %631 = vmatpush1.msra.mxu0 0.0
    %632 = vmatprep.subr.mxu0 0.0
    %633 = vmatpush1.msra.mxu0 0.0
    %634 = vmatprep.subr.mxu0 0.0
    %635 = vmatpush1.msra.mxu0 0.0
    %636 = vmatprep.mubr.f32.mxu0 0.0
    %637 = vmatmul.mubr.f32.gmra.mrb[0].mxu0 %v570
    %v638 = vpop.f32.mrb[0].mxu0
    %v639 = vadd.f32 0.0, %v638
    %v640 = vpop.f32.mrb[0].mxu0
    %v641 = vadd.f32 0.0, %v640
    %642 = vdwg.mxu0
    %s643 = smul.u32 3, 2
    %s644 = smul.addr %s643, 8
    %s645 = scalar_lea.vmem [#allocation2], %s644
    %v646 = vld [vmem:[%s645] sm:$0xff]
    %v647 = vld [vmem:[%s645 + $0x8] sm:$0xff]
    %v648 = vadd.f32 %v646, %v639
    %v649 = vxor.u32 %v648, 2147483648
    %v650 = vmul.f32 %v649, 1.442695
    %v651 = vpow.pop %v650
    %v652 = vadd.f32 %v651, 1.0
    %v653 = vrcp.pop %v652
    %v654 = vmul.f32 1.0, %v653
    %v655 = vadd.f32 %v641, %v259
    %v656 = vmul.f32 %v654, %v655
    %v657 = vadd.f32 %v647, %v656
    %v658 = vtanh.pop %v657
    %v659 = vsub.f32 1.0, %v654
    %661 = vrot.lane.b32.xlu0 %v658, 64
    %v662 = vpop.permute.xlu0 %661
    %v664 = vmul.f32 %v659, %v662
    %v665 = vmul.f32 %v654, %v563
    %v666 = vadd.f32 %v664, %v665
    %668 = vrot.lane.b32.xlu0 %v666, 64
    %v669 = vpop.permute.xlu0 %668
    %s671 = scalar_lea.vmem [#allocation3], 24
    %672 = vst.msk [vmem:[%s671] sm:$0xff] %vm222, %v669
    %v673 = vsel %vm222, %v669, 0
    %675 = vmatprep.subr.mxu0 %v239
    %676 = vmatpush1.msra.mxu0 %v238
    %677 = vmatprep.subr.mxu0 %v241
    %678 = vmatpush1.msra.mxu0 %v240
    %679 = vmatprep.subr.mxu0 %v243
    %680 = vmatpush1.msra.mxu0 %v242
    %681 = vmatprep.subr.mxu0 %v245
    %682 = vmatpush1.msra.mxu0 %v244
    %683 = vmatprep.subr.mxu0 %v247
    %684 = vmatpush1.msra.mxu0 %v246
    %685 = vmatprep.subr.mxu0 %v249
    %686 = vmatpush1.msra.mxu0 %v248
    %687 = vmatprep.subr.mxu0 %v251
    %688 = vmatpush1.msra.mxu0 %v250
    %689 = vmatprep.subr.mxu0 %v253
    %690 = vmatpush1.msra.mxu0 %v252
    %691 = vmatprep.subr.mxu0 0.0
    %692 = vmatpush1.msra.mxu0 0.0
    %693 = vmatprep.subr.mxu0 0.0
    %694 = vmatpush1.msra.mxu0 0.0
    %695 = vmatprep.subr.mxu0 0.0
    %696 = vmatpush1.msra.mxu0 0.0
    %697 = vmatprep.subr.mxu0 0.0
    %698 = vmatpush1.msra.mxu0 0.0
    %699 = vmatprep.subr.mxu0 0.0
    %700 = vmatpush1.msra.mxu0 0.0
    %701 = vmatprep.subr.mxu0 0.0
    %702 = vmatpush1.msra.mxu0 0.0
    %703 = vmatprep.subr.mxu0 0.0
    %704 = vmatpush1.msra.mxu0 0.0
    %705 = vmatprep.subr.mxu0 0.0
    %706 = vmatpush1.msra.mxu0 0.0
    %707 = vmatprep.subr.mxu0 0.0
    %708 = vmatpush1.msra.mxu0 0.0
    %709 = vmatprep.subr.mxu0 0.0
    %710 = vmatpush1.msra.mxu0 0.0
    %711 = vmatprep.subr.mxu0 0.0
    %712 = vmatpush1.msra.mxu0 0.0
    %713 = vmatprep.subr.mxu0 0.0
    %714 = vmatpush1.msra.mxu0 0.0
    %715 = vmatprep.subr.mxu0 0.0
    %716 = vmatpush1.msra.mxu0 0.0
    %717 = vmatprep.subr.mxu0 0.0
    %718 = vmatpush1.msra.mxu0 0.0
    %719 = vmatprep.subr.mxu0 0.0
    %720 = vmatpush1.msra.mxu0 0.0
    %721 = vmatprep.subr.mxu0 0.0
    %722 = vmatpush1.msra.mxu0 0.0
    %723 = vmatprep.subr.mxu0 0.0
    %724 = vmatpush1.msra.mxu0 0.0
    %725 = vmatprep.subr.mxu0 0.0
    %726 = vmatpush1.msra.mxu0 0.0
    %727 = vmatprep.subr.mxu0 0.0
    %728 = vmatpush1.msra.mxu0 0.0
    %729 = vmatprep.subr.mxu0 0.0
    %730 = vmatpush1.msra.mxu0 0.0
    %731 = vmatprep.subr.mxu0 0.0
    %732 = vmatpush1.msra.mxu0 0.0
    %733 = vmatprep.subr.mxu0 0.0
    %734 = vmatpush1.msra.mxu0 0.0
    %735 = vmatprep.subr.mxu0 0.0
    %736 = vmatpush1.msra.mxu0 0.0
    %737 = vmatprep.subr.mxu0 0.0
    %738 = vmatpush1.msra.mxu0 0.0
    %739 = vmatprep.mubr.f32.mxu0 0.0
    %740 = vmatmul.mubr.f32.gmra.mrb[0].mxu0 %v673
    %v741 = vpop.f32.mrb[0].mxu0
    %v742 = vadd.f32 0.0, %v741
    %v743 = vpop.f32.mrb[0].mxu0
    %v744 = vadd.f32 0.0, %v743
    %745 = vdwg.mxu0
    %s746 = smul.u32 4, 2
    %s747 = smul.addr %s746, 8
    %s748 = scalar_lea.vmem [#allocation2], %s747
    %v749 = vld [vmem:[%s748] sm:$0xff]
    %v750 = vld [vmem:[%s748 + $0x8] sm:$0xff]
    %v751 = vadd.f32 %v749, %v742
    %v752 = vxor.u32 %v751, 2147483648
    %v753 = vmul.f32 %v752, 1.442695
    %v754 = vpow.pop %v753
    %v755 = vadd.f32 %v754, 1.0
    %v756 = vrcp.pop %v755
    %v757 = vmul.f32 1.0, %v756
    %v758 = vadd.f32 %v744, %v259
    %v759 = vmul.f32 %v757, %v758
    %v760 = vadd.f32 %v750, %v759
    %v761 = vtanh.pop %v760
    %v762 = vsub.f32 1.0, %v757
    %764 = vrot.lane.b32.xlu0 %v761, 64
    %v765 = vpop.permute.xlu0 %764
    %v767 = vmul.f32 %v762, %v765
    %v768 = vmul.f32 %v757, %v666
    %v769 = vadd.f32 %v767, %v768
    %771 = vrot.lane.b32.xlu0 %v769, 64
    %v772 = vpop.permute.xlu0 %771
    %s774 = scalar_lea.vmem [#allocation3], 32
    %775 = vst.msk [vmem:[%s774] sm:$0xff] %vm222, %v772
    %v776 = vsel %vm222, %v772, 0
    %778 = vmatprep.subr.mxu0 %v239
    %779 = vmatpush1.msra.mxu0 %v238
    %780 = vmatprep.subr.mxu0 %v241
    %781 = vmatpush1.msra.mxu0 %v240
    %782 = vmatprep.subr.mxu0 %v243
    %783 = vmatpush1.msra.mxu0 %v242
    %784 = vmatprep.subr.mxu0 %v245
    %785 = vmatpush1.msra.mxu0 %v244
    %786 = vmatprep.subr.mxu0 %v247
    %787 = vmatpush1.msra.mxu0 %v246
    %788 = vmatprep.subr.mxu0 %v249
    %789 = vmatpush1.msra.mxu0 %v248
    %790 = vmatprep.subr.mxu0 %v251
    %791 = vmatpush1.msra.mxu0 %v250
    %792 = vmatprep.subr.mxu0 %v253
    %793 = vmatpush1.msra.mxu0 %v252
    %794 = vmatprep.subr.mxu0 0.0
    %795 = vmatpush1.msra.mxu0 0.0
    %796 = vmatprep.subr.mxu0 0.0
    %797 = vmatpush1.msra.mxu0 0.0
    %798 = vmatprep.subr.mxu0 0.0
    %799 = vmatpush1.msra.mxu0 0.0
    %800 = vmatprep.subr.mxu0 0.0
    %801 = vmatpush1.msra.mxu0 0.0
    %802 = vmatprep.subr.mxu0 0.0
    %803 = vmatpush1.msra.mxu0 0.0
    %804 = vmatprep.subr.mxu0 0.0
    %805 = vmatpush1.msra.mxu0 0.0
    %806 = vmatprep.subr.mxu0 0.0
    %807 = vmatpush1.msra.mxu0 0.0
    %808 = vmatprep.subr.mxu0 0.0
    %809 = vmatpush1.msra.mxu0 0.0
    %810 = vmatprep.subr.mxu0 0.0
    %811 = vmatpush1.msra.mxu0 0.0
    %812 = vmatprep.subr.mxu0 0.0
    %813 = vmatpush1.msra.mxu0 0.0
    %814 = vmatprep.subr.mxu0 0.0
    %815 = vmatpush1.msra.mxu0 0.0
    %816 = vmatprep.subr.mxu0 0.0
    %817 = vmatpush1.msra.mxu0 0.0
    %818 = vmatprep.subr.mxu0 0.0
    %819 = vmatpush1.msra.mxu0 0.0
    %820 = vmatprep.subr.mxu0 0.0
    %821 = vmatpush1.msra.mxu0 0.0
    %822 = vmatprep.subr.mxu0 0.0
    %823 = vmatpush1.msra.mxu0 0.0
    %824 = vmatprep.subr.mxu0 0.0
    %825 = vmatpush1.msra.mxu0 0.0
    %826 = vmatprep.subr.mxu0 0.0
    %827 = vmatpush1.msra.mxu0 0.0
    %828 = vmatprep.subr.mxu0 0.0
    %829 = vmatpush1.msra.mxu0 0.0
    %830 = vmatprep.subr.mxu0 0.0
    %831 = vmatpush1.msra.mxu0 0.0
    %832 = vmatprep.subr.mxu0 0.0
    %833 = vmatpush1.msra.mxu0 0.0
    %834 = vmatprep.subr.mxu0 0.0
    %835 = vmatpush1.msra.mxu0 0.0
    %836 = vmatprep.subr.mxu0 0.0
    %837 = vmatpush1.msra.mxu0 0.0
    %838 = vmatprep.subr.mxu0 0.0
    %839 = vmatpush1.msra.mxu0 0.0
    %840 = vmatprep.subr.mxu0 0.0
    %841 = vmatpush1.msra.mxu0 0.0
    %842 = vmatprep.mubr.f32.mxu0 0.0
    %843 = vmatmul.mubr.f32.gmra.mrb[0].mxu0 %v776
    %v844 = vpop.f32.mrb[0].mxu0
    %v845 = vadd.f32 0.0, %v844
    %v846 = vpop.f32.mrb[0].mxu0
    %v847 = vadd.f32 0.0, %v846
    %848 = vdwg.mxu0
    %s849 = smul.u32 5, 2
    %s850 = smul.addr %s849, 8
    %s851 = scalar_lea.vmem [#allocation2], %s850
    %v852 = vld [vmem:[%s851] sm:$0xff]
    %v853 = vld [vmem:[%s851 + $0x8] sm:$0xff]
    %v854 = vadd.f32 %v852, %v845
    %v855 = vxor.u32 %v854, 2147483648
    %v856 = vmul.f32 %v855, 1.442695
    %v857 = vpow.pop %v856
    %v858 = vadd.f32 %v857, 1.0
    %v859 = vrcp.pop %v858
    %v860 = vmul.f32 1.0, %v859
    %v861 = vadd.f32 %v847, %v259
    %v862 = vmul.f32 %v860, %v861
    %v863 = vadd.f32 %v853, %v862
    %v864 = vtanh.pop %v863
    %v865 = vsub.f32 1.0, %v860
    %867 = vrot.lane.b32.xlu0 %v864, 64
    %v868 = vpop.permute.xlu0 %867
    %v870 = vmul.f32 %v865, %v868
    %v871 = vmul.f32 %v860, %v769
    %v872 = vadd.f32 %v870, %v871
    %874 = vrot.lane.b32.xlu0 %v872, 64
    %v875 = vpop.permute.xlu0 %874
    %s877 = scalar_lea.vmem [#allocation3], 40
    %878 = vst.msk [vmem:[%s877] sm:$0xff] %vm222, %v875
    %v879 = vsel %vm222, %v875, 0
    %881 = vmatprep.subr.mxu0 %v239
    %882 = vmatpush1.msra.mxu0 %v238
    %883 = vmatprep.subr.mxu0 %v241
    %884 = vmatpush1.msra.mxu0 %v240
    %885 = vmatprep.subr.mxu0 %v243
    %886 = vmatpush1.msra.mxu0 %v242
    %887 = vmatprep.subr.mxu0 %v245
    %888 = vmatpush1.msra.mxu0 %v244
    %889 = vmatprep.subr.mxu0 %v247
    %890 = vmatpush1.msra.mxu0 %v246
    %891 = vmatprep.subr.mxu0 %v249
    %892 = vmatpush1.msra.mxu0 %v248
    %893 = vmatprep.subr.mxu0 %v251
    %894 = vmatpush1.msra.mxu0 %v250
    %895 = vmatprep.subr.mxu0 %v253
    %896 = vmatpush1.msra.mxu0 %v252
    %897 = vmatprep.subr.mxu0 0.0
    %898 = vmatpush1.msra.mxu0 0.0
    %899 = vmatprep.subr.mxu0 0.0
    %900 = vmatpush1.msra.mxu0 0.0
    %901 = vmatprep.subr.mxu0 0.0
    %902 = vmatpush1.msra.mxu0 0.0
    %903 = vmatprep.subr.mxu0 0.0
    %904 = vmatpush1.msra.mxu0 0.0
    %905 = vmatprep.subr.mxu0 0.0
    %906 = vmatpush1.msra.mxu0 0.0
    %907 = vmatprep.subr.mxu0 0.0
    %908 = vmatpush1.msra.mxu0 0.0
    %909 = vmatprep.subr.mxu0 0.0
    %910 = vmatpush1.msra.mxu0 0.0
    %911 = vmatprep.subr.mxu0 0.0
    %912 = vmatpush1.msra.mxu0 0.0
    %913 = vmatprep.subr.mxu0 0.0
    %914 = vmatpush1.msra.mxu0 0.0
    %915 = vmatprep.subr.mxu0 0.0
    %916 = vmatpush1.msra.mxu0 0.0
    %917 = vmatprep.subr.mxu0 0.0
    %918 = vmatpush1.msra.mxu0 0.0
    %919 = vmatprep.subr.mxu0 0.0
    %920 = vmatpush1.msra.mxu0 0.0
    %921 = vmatprep.subr.mxu0 0.0
    %922 = vmatpush1.msra.mxu0 0.0
    %923 = vmatprep.subr.mxu0 0.0
    %924 = vmatpush1.msra.mxu0 0.0
    %925 = vmatprep.subr.mxu0 0.0
    %926 = vmatpush1.msra.mxu0 0.0
    %927 = vmatprep.subr.mxu0 0.0
    %928 = vmatpush1.msra.mxu0 0.0
    %929 = vmatprep.subr.mxu0 0.0
    %930 = vmatpush1.msra.mxu0 0.0
    %931 = vmatprep.subr.mxu0 0.0
    %932 = vmatpush1.msra.mxu0 0.0
    %933 = vmatprep.subr.mxu0 0.0
    %934 = vmatpush1.msra.mxu0 0.0
    %935 = vmatprep.subr.mxu0 0.0
    %936 = vmatpush1.msra.mxu0 0.0
    %937 = vmatprep.subr.mxu0 0.0
    %938 = vmatpush1.msra.mxu0 0.0
    %939 = vmatprep.subr.mxu0 0.0
    %940 = vmatpush1.msra.mxu0 0.0
    %941 = vmatprep.subr.mxu0 0.0
    %942 = vmatpush1.msra.mxu0 0.0
    %943 = vmatprep.subr.mxu0 0.0
    %944 = vmatpush1.msra.mxu0 0.0
    %945 = vmatprep.mubr.f32.mxu0 0.0
    %946 = vmatmul.mubr.f32.gmra.mrb[0].mxu0 %v879
    %v947 = vpop.f32.mrb[0].mxu0
    %v948 = vadd.f32 0.0, %v947
    %v949 = vpop.f32.mrb[0].mxu0
    %v950 = vadd.f32 0.0, %v949
    %951 = vdwg.mxu0
    %s952 = smul.u32 6, 2
    %s953 = smul.addr %s952, 8
    %s954 = scalar_lea.vmem [#allocation2], %s953
    %v955 = vld [vmem:[%s954] sm:$0xff]
    %v956 = vld [vmem:[%s954 + $0x8] sm:$0xff]
    %v957 = vadd.f32 %v955, %v948
    %v958 = vxor.u32 %v957, 2147483648
    %v959 = vmul.f32 %v958, 1.442695
    %v960 = vpow.pop %v959
    %v961 = vadd.f32 %v960, 1.0
    %v962 = vrcp.pop %v961
    %v963 = vmul.f32 1.0, %v962
    %v964 = vadd.f32 %v950, %v259
    %v965 = vmul.f32 %v963, %v964
    %v966 = vadd.f32 %v956, %v965
    %v967 = vtanh.pop %v966
    %v968 = vsub.f32 1.0, %v963
    %970 = vrot.lane.b32.xlu0 %v967, 64
    %v971 = vpop.permute.xlu0 %970
    %v973 = vmul.f32 %v968, %v971
    %v974 = vmul.f32 %v963, %v872
    %v975 = vadd.f32 %v973, %v974
    %977 = vrot.lane.b32.xlu0 %v975, 64
    %v978 = vpop.permute.xlu0 %977
    %s980 = scalar_lea.vmem [#allocation3], 48
    %981 = vst.msk [vmem:[%s980] sm:$0xff] %vm222, %v978
    %v982 = vsel %vm222, %v978, 0
    %984 = vmatprep.subr.mxu0 %v239
    %985 = vmatpush1.msra.mxu0 %v238
    %986 = vmatprep.subr.mxu0 %v241
    %987 = vmatpush1.msra.mxu0 %v240
    %988 = vmatprep.subr.mxu0 %v243
    %989 = vmatpush1.msra.mxu0 %v242
    %990 = vmatprep.subr.mxu0 %v245
    %991 = vmatpush1.msra.mxu0 %v244
    %992 = vmatprep.subr.mxu0 %v247
    %993 = vmatpush1.msra.mxu0 %v246
    %994 = vmatprep.subr.mxu0 %v249
    %995 = vmatpush1.msra.mxu0 %v248
    %996 = vmatprep.subr.mxu0 %v251
    %997 = vmatpush1.msra.mxu0 %v250
    %998 = vmatprep.subr.mxu0 %v253
    %999 = vmatpush1.msra.mxu0 %v252
    %1000 = vmatprep.subr.mxu0 0.0
    %1001 = vmatpush1.msra.mxu0 0.0
    %1002 = vmatprep.subr.mxu0 0.0
    %1003 = vmatpush1.msra.mxu0 0.0
    %1004 = vmatprep.subr.mxu0 0.0
    %1005 = vmatpush1.msra.mxu0 0.0
    %1006 = vmatprep.subr.mxu0 0.0
    %1007 = vmatpush1.msra.mxu0 0.0
    %1008 = vmatprep.subr.mxu0 0.0
    %1009 = vmatpush1.msra.mxu0 0.0
    %1010 = vmatprep.subr.mxu0 0.0
    %1011 = vmatpush1.msra.mxu0 0.0
    %1012 = vmatprep.subr.mxu0 0.0
    %1013 = vmatpush1.msra.mxu0 0.0
    %1014 = vmatprep.subr.mxu0 0.0
    %1015 = vmatpush1.msra.mxu0 0.0
    %1016 = vmatprep.subr.mxu0 0.0
    %1017 = vmatpush1.msra.mxu0 0.0
    %1018 = vmatprep.subr.mxu0 0.0
    %1019 = vmatpush1.msra.mxu0 0.0
    %1020 = vmatprep.subr.mxu0 0.0
    %1021 = vmatpush1.msra.mxu0 0.0
    %1022 = vmatprep.subr.mxu0 0.0
    %1023 = vmatpush1.msra.mxu0 0.0
    %1024 = vmatprep.subr.mxu0 0.0
    %1025 = vmatpush1.msra.mxu0 0.0
    %1026 = vmatprep.subr.mxu0 0.0
    %1027 = vmatpush1.msra.mxu0 0.0
    %1028 = vmatprep.subr.mxu0 0.0
    %1029 = vmatpush1.msra.mxu0 0.0
    %1030 = vmatprep.subr.mxu0 0.0
    %1031 = vmatpush1.msra.mxu0 0.0
    %1032 = vmatprep.subr.mxu0 0.0
    %1033 = vmatpush1.msra.mxu0 0.0
    %1034 = vmatprep.subr.mxu0 0.0
    %1035 = vmatpush1.msra.mxu0 0.0
    %1036 = vmatprep.subr.mxu0 0.0
    %1037 = vmatpush1.msra.mxu0 0.0
    %1038 = vmatprep.subr.mxu0 0.0
    %1039 = vmatpush1.msra.mxu0 0.0
    %1040 = vmatprep.subr.mxu0 0.0
    %1041 = vmatpush1.msra.mxu0 0.0
    %1042 = vmatprep.subr.mxu0 0.0
    %1043 = vmatpush1.msra.mxu0 0.0
    %1044 = vmatprep.subr.mxu0 0.0
    %1045 = vmatpush1.msra.mxu0 0.0
    %1046 = vmatprep.subr.mxu0 0.0
    %1047 = vmatpush1.msra.mxu0 0.0
    %1048 = vmatprep.mubr.f32.mxu0 0.0
    %1049 = vmatmul.mubr.f32.gmra.mrb[0].mxu0 %v982
    %v1050 = vpop.f32.mrb[0].mxu0
    %v1051 = vadd.f32 0.0, %v1050
    %v1052 = vpop.f32.mrb[0].mxu0
    %v1053 = vadd.f32 0.0, %v1052
    %1054 = vdwg.mxu0
    %s1055 = smul.u32 7, 2
    %s1056 = smul.addr %s1055, 8
    %s1057 = scalar_lea.vmem [#allocation2], %s1056
    %v1058 = vld [vmem:[%s1057] sm:$0xff]
    %v1059 = vld [vmem:[%s1057 + $0x8] sm:$0xff]
    %v1060 = vadd.f32 %v1058, %v1051
    %v1061 = vxor.u32 %v1060, 2147483648
    %v1062 = vmul.f32 %v1061, 1.442695
    %v1063 = vpow.pop %v1062
    %v1064 = vadd.f32 %v1063, 1.0
    %v1065 = vrcp.pop %v1064
    %v1066 = vmul.f32 1.0, %v1065
    %v1067 = vadd.f32 %v1053, %v259
    %v1068 = vmul.f32 %v1066, %v1067
    %v1069 = vadd.f32 %v1059, %v1068
    %v1070 = vtanh.pop %v1069
    %v1071 = vsub.f32 1.0, %v1066
    %1073 = vrot.lane.b32.xlu0 %v1070, 64
    %v1074 = vpop.permute.xlu0 %1073
    %v1076 = vmul.f32 %v1071, %v1074
    %v1077 = vmul.f32 %v1066, %v975
    %v1078 = vadd.f32 %v1076, %v1077
    %1080 = vrot.lane.b32.xlu0 %v1078, 64
    %v1081 = vpop.permute.xlu0 %1080
    %s1083 = scalar_lea.vmem [#allocation3], 56
    %1084 = vst.msk [vmem:[%s1083] sm:$0xff] %vm222, %v1081
    %v1085 = vld [vmem:[#allocation3] sm:$0xff]
    %v1086 = vld [vmem:[#allocation3 + $0x8] sm:$0xff]
    %v1087 = vld [vmem:[#allocation3 + $0x10] sm:$0xff]
    %v1088 = vld [vmem:[#allocation3 + $0x18] sm:$0xff]
    %v1089 = vld [vmem:[#allocation3 + $0x20] sm:$0xff]
    %v1090 = vld [vmem:[#allocation3 + $0x28] sm:$0xff]
    %v1091 = vld [vmem:[#allocation3 + $0x30] sm:$0xff]
    %v1092 = vld [vmem:[#allocation3 + $0x38] sm:$0xff]
    %v1093 = vld [vmem:[%s5] sm:$0xff]
    %v1094 = vld [vmem:[%s5 + $0x8] sm:$0xff]
    %v1095 = vld [vmem:[%s5 + $0x10] sm:$0xff]
    %v1096 = vld [vmem:[%s5 + $0x18] sm:$0xff]
    %v1097 = vld [vmem:[%s5 + $0x20] sm:$0xff]
    %v1098 = vld [vmem:[%s5 + $0x28] sm:$0xff]
    %v1099 = vld [vmem:[%s5 + $0x30] sm:$0xff]
    %v1100 = vld [vmem:[%s5 + $0x38] sm:$0xff]
    %v1101 = vld [vmem:[%s6] sm:$0x1]
    %v1103 = vlaneseq
    %v1104 = vshrl.u32 %v1103, 7
    %v1105 = vsub.s32 0, %v1104
    %v1106 = vrot.slane %v1101, %v1105
    %v1109 = vsel %vm222, %v1085, 0
    %v1112 = vsel %vm222, %v1086, 0
    %v1115 = vsel %vm222, %v1087, 0
    %v1118 = vsel %vm222, %v1088, 0
    %v1121 = vsel %vm222, %v1089, 0
    %v1124 = vsel %vm222, %v1090, 0
    %v1127 = vsel %vm222, %v1091, 0
    %v1130 = vsel %vm222, %v1092, 0
    %1132 = vmatprep.subr.mxu0 0.0
    %1133 = vmatpush1.msra.mxu0 %v1093
    %1134 = vmatprep.subr.mxu0 0.0
    %1135 = vmatpush1.msra.mxu0 %v1094
    %1136 = vmatprep.subr.mxu0 0.0
    %1137 = vmatpush1.msra.mxu0 %v1095
    %1138 = vmatprep.subr.mxu0 0.0
    %1139 = vmatpush1.msra.mxu0 %v1096
    %1140 = vmatprep.subr.mxu0 0.0
    %1141 = vmatpush1.msra.mxu0 %v1097
    %1142 = vmatprep.subr.mxu0 0.0
    %1143 = vmatpush1.msra.mxu0 %v1098
    %1144 = vmatprep.subr.mxu0 0.0
    %1145 = vmatpush1.msra.mxu0 %v1099
    %1146 = vmatprep.subr.mxu0 0.0
    %1147 = vmatpush1.msra.mxu0 %v1100
    %1148 = vmatprep.subr.mxu0 0.0
    %1149 = vmatpush1.msra.mxu0 0.0
    %1150 = vmatprep.subr.mxu0 0.0
    %1151 = vmatpush1.msra.mxu0 0.0
    %1152 = vmatprep.subr.mxu0 0.0
    %1153 = vmatpush1.msra.mxu0 0.0
    %1154 = vmatprep.subr.mxu0 0.0
    %1155 = vmatpush1.msra.mxu0 0.0
    %1156 = vmatprep.subr.mxu0 0.0
    %1157 = vmatpush1.msra.mxu0 0.0
    %1158 = vmatprep.subr.mxu0 0.0
    %1159 = vmatpush1.msra.mxu0 0.0
    %1160 = vmatprep.subr.mxu0 0.0
    %1161 = vmatpush1.msra.mxu0 0.0
    %1162 = vmatprep.subr.mxu0 0.0
    %1163 = vmatpush1.msra.mxu0 0.0
    %1164 = vmatprep.subr.mxu0 0.0
    %1165 = vmatpush1.msra.mxu0 0.0
    %1166 = vmatprep.subr.mxu0 0.0
    %1167 = vmatpush1.msra.mxu0 0.0
    %1168 = vmatprep.subr.mxu0 0.0
    %1169 = vmatpush1.msra.mxu0 0.0
    %1170 = vmatprep.subr.mxu0 0.0
    %1171 = vmatpush1.msra.mxu0 0.0
    %1172 = vmatprep.subr.mxu0 0.0
    %1173 = vmatpush1.msra.mxu0 0.0
    %1174 = vmatprep.subr.mxu0 0.0
    %1175 = vmatpush1.msra.mxu0 0.0
    %1176 = vmatprep.subr.mxu0 0.0
    %1177 = vmatpush1.msra.mxu0 0.0
    %1178 = vmatprep.subr.mxu0 0.0
    %1179 = vmatpush1.msra.mxu0 0.0
    %1180 = vmatprep.subr.mxu0 0.0
    %1181 = vmatpush1.msra.mxu0 0.0
    %1182 = vmatprep.subr.mxu0 0.0
    %1183 = vmatpush1.msra.mxu0 0.0
    %1184 = vmatprep.subr.mxu0 0.0
    %1185 = vmatpush1.msra.mxu0 0.0
    %1186 = vmatprep.subr.mxu0 0.0
    %1187 = vmatpush1.msra.mxu0 0.0
    %1188 = vmatprep.subr.mxu0 0.0
    %1189 = vmatpush1.msra.mxu0 0.0
    %1190 = vmatprep.subr.mxu0 0.0
    %1191 = vmatpush1.msra.mxu0 0.0
    %1192 = vmatprep.subr.mxu0 0.0
    %1193 = vmatpush1.msra.mxu0 0.0
    %1194 = vmatprep.subr.mxu0 0.0
    %1195 = vmatpush1.msra.mxu0 0.0
    %1196 = vmatprep.mubr.f32.mxu0 0.0
    %1197 = vmatmul.mubr.f32.gmra.mrb[0].mxu0 %v1109
    %v1198 = vpop.f32.mrb[0].mxu0
    %v1199 = vadd.f32 %v1106, %v1198
    %v1200 = vpop.f32.mrb[0].mxu0
    %1201 = vmatprep.mubr.f32.mxu0 0.0
    %1202 = vmatmul.mubr.f32.gmra.mrb[0].mxu0 %v1112
    %v1203 = vpop.f32.mrb[0].mxu0
    %v1204 = vadd.f32 %v1106, %v1203
    %v1205 = vpop.f32.mrb[0].mxu0
    %1206 = vmatprep.mubr.f32.mxu0 0.0
    %1207 = vmatmul.mubr.f32.gmra.mrb[0].mxu0 %v1115
    %v1208 = vpop.f32.mrb[0].mxu0
    %v1209 = vadd.f32 %v1106, %v1208
    %v1210 = vpop.f32.mrb[0].mxu0
    %1211 = vmatprep.mubr.f32.mxu0 0.0
    %1212 = vmatmul.mubr.f32.gmra.mrb[0].mxu0 %v1118
    %v1213 = vpop.f32.mrb[0].mxu0
    %v1214 = vadd.f32 %v1106, %v1213
    %v1215 = vpop.f32.mrb[0].mxu0
    %1216 = vmatprep.mubr.f32.mxu0 0.0
    %1217 = vmatmul.mubr.f32.gmra.mrb[0].mxu0 %v1121
    %v1218 = vpop.f32.mrb[0].mxu0
    %v1219 = vadd.f32 %v1106, %v1218
    %v1220 = vpop.f32.mrb[0].mxu0
    %1221 = vmatprep.mubr.f32.mxu0 0.0
    %1222 = vmatmul.mubr.f32.gmra.mrb[0].mxu0 %v1124
    %v1223 = vpop.f32.mrb[0].mxu0
    %v1224 = vadd.f32 %v1106, %v1223
    %v1225 = vpop.f32.mrb[0].mxu0
    %1226 = vmatprep.mubr.f32.mxu0 0.0
    %1227 = vmatmul.mubr.f32.gmra.mrb[0].mxu0 %v1127
    %v1228 = vpop.f32.mrb[0].mxu0
    %v1229 = vadd.f32 %v1106, %v1228
    %v1230 = vpop.f32.mrb[0].mxu0
    %1231 = vmatprep.mubr.f32.mxu0 0.0
    %1232 = vmatmul.mubr.f32.gmra.mrb[0].mxu0 %v1130
    %v1233 = vpop.f32.mrb[0].mxu0
    %v1234 = vadd.f32 %v1106, %v1233
    %v1235 = vpop.f32.mrb[0].mxu0
    %1236 = vdwg.mxu0
    %v1237 = vmax.f32 %v1199, 0.0
    %v1238 = vmax.f32 %v1204, 0.0
    %v1239 = vmax.f32 %v1209, 0.0
    %v1240 = vmax.f32 %v1214, 0.0
    %v1241 = vmax.f32 %v1219, 0.0
    %v1242 = vmax.f32 %v1224, 0.0
    %v1243 = vmax.f32 %v1229, 0.0
    %v1244 = vmax.f32 %v1234, 0.0
    %v1245 = vld [vmem:[%s7] sm:$0xff]
    %v1246 = vld [vmem:[%s7 + $0x8] sm:$0xff]
    %v1247 = vld [vmem:[%s7 + $0x10] sm:$0xff]
    %v1248 = vld [vmem:[%s7 + $0x18] sm:$0xff]
    %v1249 = vld [vmem:[%s8] sm:$0x1]
    %v1251 = vlaneseq
    %v1252 = vshrl.u32 %v1251, 7
    %v1253 = vsub.s32 0, %v1252
    %v1254 = vrot.slane %v1249, %v1253
    %vm1256 = vcmask 261120
    %v1258 = vsel %vm1256, %v1237, 0
    %v1261 = vsel %vm1256, %v1238, 0
    %v1264 = vsel %vm1256, %v1239, 0
    %v1267 = vsel %vm1256, %v1240, 0
    %v1270 = vsel %vm1256, %v1241, 0
    %v1273 = vsel %vm1256, %v1242, 0
    %v1276 = vsel %vm1256, %v1243, 0
    %v1279 = vsel %vm1256, %v1244, 0
    %1281 = vmatprep.subr.mxu0 0.0
    %1282 = vmatpush1.msra.mxu0 %v1245
    %1283 = vmatprep.subr.mxu0 0.0
    %1284 = vmatpush1.msra.mxu0 %v1246
    %1285 = vmatprep.subr.mxu0 0.0
    %1286 = vmatpush1.msra.mxu0 %v1247
    %1287 = vmatprep.subr.mxu0 0.0
    %1288 = vmatpush1.msra.mxu0 %v1248
    %1289 = vmatprep.subr.mxu0 0.0
    %1290 = vmatpush1.msra.mxu0 0.0
    %1291 = vmatprep.subr.mxu0 0.0
    %1292 = vmatpush1.msra.mxu0 0.0
    %1293 = vmatprep.subr.mxu0 0.0
    %1294 = vmatpush1.msra.mxu0 0.0
    %1295 = vmatprep.subr.mxu0 0.0
    %1296 = vmatpush1.msra.mxu0 0.0
    %1297 = vmatprep.subr.mxu0 0.0
    %1298 = vmatpush1.msra.mxu0 0.0
    %1299 = vmatprep.subr.mxu0 0.0
    %1300 = vmatpush1.msra.mxu0 0.0
    %1301 = vmatprep.subr.mxu0 0.0
    %1302 = vmatpush1.msra.mxu0 0.0
    %1303 = vmatprep.subr.mxu0 0.0
    %1304 = vmatpush1.msra.mxu0 0.0
    %1305 = vmatprep.subr.mxu0 0.0
    %1306 = vmatpush1.msra.mxu0 0.0
    %1307 = vmatprep.subr.mxu0 0.0
    %1308 = vmatpush1.msra.mxu0 0.0
    %1309 = vmatprep.subr.mxu0 0.0
    %1310 = vmatpush1.msra.mxu0 0.0
    %1311 = vmatprep.subr.mxu0 0.0
    %1312 = vmatpush1.msra.mxu0 0.0
    %1313 = vmatprep.subr.mxu0 0.0
    %1314 = vmatpush1.msra.mxu0 0.0
    %1315 = vmatprep.subr.mxu0 0.0
    %1316 = vmatpush1.msra.mxu0 0.0
    %1317 = vmatprep.subr.mxu0 0.0
    %1318 = vmatpush1.msra.mxu0 0.0
    %1319 = vmatprep.subr.mxu0 0.0
    %1320 = vmatpush1.msra.mxu0 0.0
    %1321 = vmatprep.subr.mxu0 0.0
    %1322 = vmatpush1.msra.mxu0 0.0
    %1323 = vmatprep.subr.mxu0 0.0
    %1324 = vmatpush1.msra.mxu0 0.0
    %1325 = vmatprep.subr.mxu0 0.0
    %1326 = vmatpush1.msra.mxu0 0.0
    %1327 = vmatprep.subr.mxu0 0.0
    %1328 = vmatpush1.msra.mxu0 0.0
    %1329 = vmatprep.subr.mxu0 0.0
    %1330 = vmatpush1.msra.mxu0 0.0
    %1331 = vmatprep.subr.mxu0 0.0
    %1332 = vmatpush1.msra.mxu0 0.0
    %1333 = vmatprep.subr.mxu0 0.0
    %1334 = vmatpush1.msra.mxu0 0.0
    %1335 = vmatprep.subr.mxu0 0.0
    %1336 = vmatpush1.msra.mxu0 0.0
    %1337 = vmatprep.subr.mxu0 0.0
    %1338 = vmatpush1.msra.mxu0 0.0
    %1339 = vmatprep.subr.mxu0 0.0
    %1340 = vmatpush1.msra.mxu0 0.0
    %1341 = vmatprep.subr.mxu0 0.0
    %1342 = vmatpush1.msra.mxu0 0.0
    %1343 = vmatprep.subr.mxu0 0.0
    %1344 = vmatpush1.msra.mxu0 0.0
    %1345 = vmatprep.mubr.f32.mxu0 0.0
    %1346 = vmatmul.mubr.f32.gmra.mrb[0].mxu0 %v1258
    %v1347 = vpop.f32.mrb[0].mxu0
    %v1348 = vadd.f32 %v1254, %v1347
    %v1349 = vpop.f32.mrb[0].mxu0
    %1350 = vmatprep.mubr.f32.mxu0 0.0
    %1351 = vmatmul.mubr.f32.gmra.mrb[0].mxu0 %v1261
    %v1352 = vpop.f32.mrb[0].mxu0
    %v1353 = vadd.f32 %v1254, %v1352
    %v1354 = vpop.f32.mrb[0].mxu0
    %1355 = vmatprep.mubr.f32.mxu0 0.0
    %1356 = vmatmul.mubr.f32.gmra.mrb[0].mxu0 %v1264
    %v1357 = vpop.f32.mrb[0].mxu0
    %v1358 = vadd.f32 %v1254, %v1357
    %v1359 = vpop.f32.mrb[0].mxu0
    %1360 = vmatprep.mubr.f32.mxu0 0.0
    %1361 = vmatmul.mubr.f32.gmra.mrb[0].mxu0 %v1267
    %v1362 = vpop.f32.mrb[0].mxu0
    %v1363 = vadd.f32 %v1254, %v1362
    %v1364 = vpop.f32.mrb[0].mxu0
    %1365 = vmatprep.mubr.f32.mxu0 0.0
    %1366 = vmatmul.mubr.f32.gmra.mrb[0].mxu0 %v1270
    %v1367 = vpop.f32.mrb[0].mxu0
    %v1368 = vadd.f32 %v1254, %v1367
    %v1369 = vpop.f32.mrb[0].mxu0
    %1370 = vmatprep.mubr.f32.mxu0 0.0
    %1371 = vmatmul.mubr.f32.gmra.mrb[0].mxu0 %v1273
    %v1372 = vpop.f32.mrb[0].mxu0
    %v1373 = vadd.f32 %v1254, %v1372
    %v1374 = vpop.f32.mrb[0].mxu0
    %1375 = vmatprep.mubr.f32.mxu0 0.0
    %1376 = vmatmul.mubr.f32.gmra.mrb[0].mxu0 %v1276
    %v1377 = vpop.f32.mrb[0].mxu0
    %v1378 = vadd.f32 %v1254, %v1377
    %v1379 = vpop.f32.mrb[0].mxu0
    %1380 = vmatprep.mubr.f32.mxu0 0.0
    %1381 = vmatmul.mubr.f32.gmra.mrb[0].mxu0 %v1279
    %v1382 = vpop.f32.mrb[0].mxu0
    %v1383 = vadd.f32 %v1254, %v1382
    %v1384 = vpop.f32.mrb[0].mxu0
    %1385 = vdwg.mxu0
    %1386 = vst [vmem:[#allocation9] sm:$0xff] %v1348
    %1387 = vst [vmem:[#allocation9 + $0x8] sm:$0xff] %v1353
    %1388 = vst [vmem:[#allocation9 + $0x10] sm:$0xff] %v1358
    %1389 = vst [vmem:[#allocation9 + $0x18] sm:$0xff] %v1363
    %1390 = vst [vmem:[#allocation9 + $0x20] sm:$0xff] %v1368
    %1391 = vst [vmem:[#allocation9 + $0x28] sm:$0xff] %v1373
    %1392 = vst [vmem:[#allocation9 + $0x30] sm:$0xff] %v1378
    %1393 = vst [vmem:[#allocation9 + $0x38] sm:$0xff] %v1383
    // Predicated region
    $region46: #{tpu_custom_call.1} parent=1 // pred_check
      _
    $region47: #{tpu_custom_call.1} parent=1 // pred_check_branch
      %1395 = sbr.rel (0) target = $region49
    $region48: #{tpu_custom_call.1} parent=1 // pred_region
      %s1397 = ssub.s32 1024, 1024
      %1398 = vsyncadd [#allocation6], %s1397
      %s1399 = sshll.u32 [#allocation9], 4
      %s1400 = int_to_ptr.vmem [resolvable:$true] %s1399
      %1405 = dma.vmem_to_hbm [thread:$0]  %s1400, 1024, %s9, [#allocation6], 128, 128, 8
    $region49: #{tpu_custom_call.1} parent=1 // pred_fallthru
      _
    // Predicated region
    $region50: #{tpu_custom_call.1} parent=1 // pred_check
      _
    $region51: #{tpu_custom_call.1} parent=1 // pred_check_branch
      %1407 = sbr.rel (0) target = $region53
    $region52: #{tpu_custom_call.1} parent=1 // pred_region
      %1408 = dma.done [#allocation6], 1024
    $region53: #{tpu_custom_call.1} parent=1 // pred_fallthru
      _
    %1409 = vsyncpa [#allocation5], 1
    %1410 = vsyncpa [#allocation8], 1
    %1411 = vsyncpa [#allocation6], 1

</llo_original>
